<compile_context>
chip_gen: v7x
topology: tpu7x:2x2x1
jax: 0.10.0
libtpu: 0.0.40
codegen_flags: <defaults>
</compile_context>

<pallas_src>
from types import SimpleNamespace

import jax
import jax.numpy as jnp
from jax import lax
from jax.experimental import pallas as pl
from jax.experimental.pallas import tpu as pltpu


def pointnet_features_kernel(x_ref,
                             w1, b1, w2, b2, w3, b3, w4, b4, w5, b5,
                             pooled_ref):
    """One grid step: `bblk` batch elements -> pooled (bblk, emb) features."""
    bblk, _cin, n = x_ref.shape

    # conv1: contract the channel axis of the native (3, N) layout directly
    # (transposed-LHS matmul) -- no wrapper-side transpose of x is needed.
    rows = []
    for b in range(bblk):
        rows.append(lax.dot_general(
            x_ref[b], w1[...],
            dimension_numbers=(((0,), (0,)), ((), ())),
            preferred_element_type=jnp.float32))                 # (N, 64)
    h = jnp.concatenate(rows, axis=0)                            # (bblk*N, 64)
    h = jnp.maximum(h + b1[...], 0.0)                            # relu(bn1(conv1(x)))

    def fused(h, w_ref, b_ref):
        z = jnp.dot(h, w_ref[...], preferred_element_type=jnp.float32) + b_ref[...]
        return jnp.maximum(z, 0.0)                               # relu(bn(conv(x)))

    h = fused(h, w2, b2)                                         # (bblk*N, 64)
    h = fused(h, w3, b3)                                         # (bblk*N, 64)
    h = fused(h, w4, b4)                                         # (bblk*N, 128)
    h = fused(h, w5, b5)                                         # (bblk*N, emb)

    # adaptive_max_pool1d(x, 1): per-batch-element max over the N points.
    pooled = jnp.concatenate(
        [jnp.max(h[b * n:(b + 1) * n, :], axis=0, keepdims=True)
         for b in range(bblk)], axis=0)                          # (bblk, emb)
    pooled_ref[0] = pooled.astype(pooled_ref.dtype)


def pointnet_head_kernel(p_ref, w6, b6, w7, b7, out_ref):
    """Classifier head over all pooled vectors in one batched matmul."""
    h = jnp.dot(p_ref[...], w6[...], preferred_element_type=jnp.float32) + b6[...]
    h = jnp.maximum(h, 0.0)                                      # relu(bn6(linear1(x)))
    # TODO(synk): nn.Dropout() is identity at inference; training-mode dropout not implemented.
    logits = jnp.dot(h, w7[...], preferred_element_type=jnp.float32) + b7[...]
    out_ref[...] = logits.astype(out_ref.dtype)


def pointnet_forward(x_ncw, ws, bs, w7, b7, *, bblk=2):
    """x_ncw: (B, 3, N) float32 in native PyTorch Conv1d layout. Returns (B, out_c)."""
    B, cin, N = x_ncw.shape
    emb = ws[4].shape[1]
    out_c = w7.shape[1]

    # Pad the batch up to a multiple of the batch block (sliced off at the end).
    grid_b = -(-B // bblk)
    Bp = grid_b * bblk
    if Bp != B:
        x_ncw = jnp.pad(x_ncw, ((0, Bp - B), (0, 0), (0, 0)))

    # ---- Kernel 1: per-point MLP + global max-pool -> pooled features ----
    in_specs = [pl.BlockSpec((bblk, cin, N), lambda i: (i, 0, 0))]
    args = [x_ncw]
    for w, bias in zip(ws[:5], bs[:5]):
        args += [w, bias]
        in_specs += [pl.BlockSpec(w.shape, lambda i: (0, 0)),
                     pl.BlockSpec(bias.shape, lambda i: (0, 0))]

    pooled = pl.pallas_call(
        pointnet_features_kernel,
        out_shape=jax.ShapeDtypeStruct((grid_b, bblk, emb), jnp.float32),
        grid=(grid_b,),
        in_specs=in_specs,
        out_specs=pl.BlockSpec((1, bblk, emb), lambda i: (i, 0, 0)),
        compiler_params=pltpu.CompilerParams(dimension_semantics=("parallel",)),
    )(*args)
    pooled = pooled.reshape(Bp, emb)                             # (Bp, emb)

    # ---- Kernel 2: classifier head, one batched matmul, lane-dense output ----
    out_pad = ((out_c + 127) // 128) * 128
    w7p = jnp.pad(w7, ((0, 0), (0, out_pad - out_c)))
    b7p = jnp.pad(b7, ((0, 0), (0, out_pad - out_c)))

    logits = pl.pallas_call(
        pointnet_head_kernel,
        out_shape=jax.ShapeDtypeStruct((Bp, out_pad), jnp.float32),
        grid=(1,),
        in_specs=[pl.BlockSpec((Bp, emb), lambda i: (0, 0)),
                  pl.BlockSpec(ws[5].shape, lambda i: (0, 0)),
                  pl.BlockSpec(bs[5].shape, lambda i: (0, 0)),
                  pl.BlockSpec(w7p.shape, lambda i: (0, 0)),
                  pl.BlockSpec(b7p.shape, lambda i: (0, 0))],
        out_specs=pl.BlockSpec((Bp, out_pad), lambda i: (0, 0)),
        compiler_params=pltpu.CompilerParams(dimension_semantics=("arbitrary",)),
    )(pooled, ws[5], bs[5], w7p, b7p)

    return logits[:B, :out_c]                                    # (B, out_c)


# ---------------------------------------------------------------------------
# Deterministic parameter construction (mirrors PointNet.__init__ shapes).
# ---------------------------------------------------------------------------
def make_params(key, emb_dims, output_channels):
    eps = 1e-5
    layer_dims = [(3, 64), (64, 64), (64, 64), (64, 128), (128, emb_dims),  # conv1..conv5
                  (emb_dims, 512)]                                          # linear1
    ws, bs = [], []
    for (cin, cout) in layer_dims:
        key, kw, kg, kb, km, kv = jax.random.split(key, 6)
        w = 0.1 * jax.random.normal(kw, (cout, cin), jnp.float32)           # PyTorch (out, in)
        gamma = jax.random.uniform(kg, (cout,), jnp.float32, 0.5, 1.5)      # bn weight
        beta = 0.1 * jax.random.normal(kb, (cout,), jnp.float32)            # bn bias
        r_mean = 0.1 * jax.random.normal(km, (cout,), jnp.float32)
        r_var = jax.random.uniform(kv, (cout,), jnp.float32, 0.5, 1.5)
        scale = gamma / jnp.sqrt(r_var + eps)
        w_folded = w.T * scale[None, :]                                     # (cin, cout)
        b_folded = (beta - r_mean * scale)[None, :]                         # (1, cout)
        ws.append(w_folded)
        bs.append(b_folded)
    key, kw7, kb7 = jax.random.split(key, 3)
    w7 = 0.1 * jax.random.normal(kw7, (output_channels, 512), jnp.float32)  # linear2 weight
    b7 = 0.1 * jax.random.normal(kb7, (output_channels,), jnp.float32)
    return ws, bs, w7.T, b7[None, :]


def pointnet_reference(x_ncw, ws, bs, w7, b7):
    """Pure-JAX reference of the same (folded-BN, eval-mode) forward."""
    h = jnp.transpose(x_ncw, (0, 2, 1))                          # (B, N, 3)
    for w, b in zip(ws[:5], bs[:5]):
        h = jnp.maximum(h @ w + b, 0.0)
    pooled = jnp.max(h, axis=1)                                  # (B, emb)
    h = jnp.maximum(pooled @ ws[5] + bs[5], 0.0)                 # (B, 512)
    return h @ w7 + b7                                           # (B, out)


if __name__ == "__main__":
    args = SimpleNamespace(emb_dims=128)
    B, N = 8, 128
    output_channels = 40
    bblk = 2                      # bblk*N = 256 rows per matmul, grid of 4 blocks

    key = jax.random.PRNGKey(0)
    key, kx = jax.random.split(key)
    x = jax.random.normal(kx, (B, 3, N), jnp.float32)            # PyTorch NCW point cloud

    ws, bs, w7, b7 = make_params(key, args.emb_dims, output_channels)

    out = pointnet_forward(x, ws, bs, w7, b7, bblk=bblk)
    out = jax.block_until_ready(out)

    ref = pointnet_reference(x, ws, bs, w7, b7)
    assert out.shape == (B, output_channels), out.shape
    assert jnp.allclose(out, ref, atol=1e-4, rtol=1e-4), float(jnp.max(jnp.abs(out - ref)))

    print("KERNEL_OK")
</pallas_src>

<mosaic_0001>
module attributes {stable_mosaic.version = 11 : i64} {
  func.func @pointnet_features_kernel(%arg0: i32, %arg1: memref<2x3x128xf32, #tpu.memory_space<vmem>>, %arg2: memref<3x64xf32, #tpu.memory_space<vmem>>, %arg3: memref<1x64xf32, #tpu.memory_space<vmem>>, %arg4: memref<64x64xf32, #tpu.memory_space<vmem>>, %arg5: memref<1x64xf32, #tpu.memory_space<vmem>>, %arg6: memref<64x64xf32, #tpu.memory_space<vmem>>, %arg7: memref<1x64xf32, #tpu.memory_space<vmem>>, %arg8: memref<64x128xf32, #tpu.memory_space<vmem>>, %arg9: memref<1x128xf32, #tpu.memory_space<vmem>>, %arg10: memref<128x128xf32, #tpu.memory_space<vmem>>, %arg11: memref<1x128xf32, #tpu.memory_space<vmem>>, %arg12: memref<1x2x128xf32, #tpu.memory_space<vmem>>) attributes {dimension_semantics = [#tpu.dimension_semantics<parallel>], iteration_bounds = array<i64: 4>, scalar_prefetch = 0 : i64, scratch_operands = 0 : i64, tpu.core_type = #tpu.core_type<tc>, window_params = [{transform_indices = @transform_0, window_bounds = array<i64: 2, 3, 128>}, {pipeline_mode = #tpu.pipeline_mode<synchronous>, transform_indices = @transform_1, window_bounds = array<i64: 3, 64>}, {pipeline_mode = #tpu.pipeline_mode<synchronous>, transform_indices = @transform_2, window_bounds = array<i64: 1, 64>}, {pipeline_mode = #tpu.pipeline_mode<synchronous>, transform_indices = @transform_3, window_bounds = array<i64: 64, 64>}, {pipeline_mode = #tpu.pipeline_mode<synchronous>, transform_indices = @transform_4, window_bounds = array<i64: 1, 64>}, {pipeline_mode = #tpu.pipeline_mode<synchronous>, transform_indices = @transform_5, window_bounds = array<i64: 64, 64>}, {pipeline_mode = #tpu.pipeline_mode<synchronous>, transform_indices = @transform_6, window_bounds = array<i64: 1, 64>}, {pipeline_mode = #tpu.pipeline_mode<synchronous>, transform_indices = @transform_7, window_bounds = array<i64: 64, 128>}, {pipeline_mode = #tpu.pipeline_mode<synchronous>, transform_indices = @transform_8, window_bounds = array<i64: 1, 128>}, {pipeline_mode = #tpu.pipeline_mode<synchronous>, transform_indices = @transform_9, window_bounds = array<i64: 128, 128>}, {pipeline_mode = #tpu.pipeline_mode<synchronous>, transform_indices = @transform_10, window_bounds = array<i64: 1, 128>}, {transform_indices = @transform_11, window_bounds = array<i64: 1, 2, 128>}]} {
    %c0 = arith.constant 0 : index
    %c0_0 = arith.constant 0 : index
    %c0_1 = arith.constant 0 : index
    %0 = vector.load %arg1[%c0, %c0_0, %c0_1] : memref<2x3x128xf32, #tpu.memory_space<vmem>>, vector<1x3x128xf32>
    %1 = vector.shape_cast %0 : vector<1x3x128xf32> to vector<3x128xf32>
    %c0_2 = arith.constant 0 : index
    %c0_3 = arith.constant 0 : index
    %2 = vector.load %arg2[%c0_2, %c0_3] : memref<3x64xf32, #tpu.memory_space<vmem>>, vector<3x64xf32>
    %cst = arith.constant dense<0.000000e+00> : vector<128x64xf32>
    %3 = tpu.matmul %1, %2, %cst {dimension_numbers = #tpu.dot_dimension_numbers<[0], [0], [1], [1], [0, 1, 1, 1], [], []>} : vector<3x128xf32>, vector<3x64xf32>, vector<128x64xf32> -> vector<128x64xf32>
    %c1 = arith.constant 1 : index
    %c0_4 = arith.constant 0 : index
    %c0_5 = arith.constant 0 : index
    %4 = vector.load %arg1[%c1, %c0_4, %c0_5] : memref<2x3x128xf32, #tpu.memory_space<vmem>>, vector<1x3x128xf32>
    %5 = vector.shape_cast %4 : vector<1x3x128xf32> to vector<3x128xf32>
    %c0_6 = arith.constant 0 : index
    %c0_7 = arith.constant 0 : index
    %6 = vector.load %arg2[%c0_6, %c0_7] : memref<3x64xf32, #tpu.memory_space<vmem>>, vector<3x64xf32>
    %cst_8 = arith.constant dense<0.000000e+00> : vector<128x64xf32>
    %7 = tpu.matmul %5, %6, %cst_8 {dimension_numbers = #tpu.dot_dimension_numbers<[0], [0], [1], [1], [0, 1, 1, 1], [], []>} : vector<3x128xf32>, vector<3x64xf32>, vector<128x64xf32> -> vector<128x64xf32>
    %8 = tpu.concatenate %3, %7 in 0 : vector<128x64xf32>, vector<128x64xf32> -> vector<256x64xf32>
    %c0_9 = arith.constant 0 : index
    %c0_10 = arith.constant 0 : index
    %9 = vector.load %arg3[%c0_9, %c0_10] : memref<1x64xf32, #tpu.memory_space<vmem>>, vector<1x64xf32>
    %10 = vector.broadcast %9 : vector<1x64xf32> to vector<256x64xf32>
    %11 = arith.addf %8, %10 : vector<256x64xf32>
    %cst_11 = arith.constant 0.000000e+00 : f32
    %12 = vector.broadcast %cst_11 : f32 to vector<256x64xf32>
    %13 = arith.maximumf %11, %12 : vector<256x64xf32>
    %c0_12 = arith.constant 0 : index
    %c0_13 = arith.constant 0 : index
    %14 = vector.load %arg4[%c0_12, %c0_13] : memref<64x64xf32, #tpu.memory_space<vmem>>, vector<64x64xf32>
    %cst_14 = arith.constant dense<0.000000e+00> : vector<256x64xf32>
    %15 = tpu.matmul %13, %14, %cst_14 {dimension_numbers = #tpu.dot_dimension_numbers<[1], [0], [0], [1], [0, 0, 1, 1], [], []>} : vector<256x64xf32>, vector<64x64xf32>, vector<256x64xf32> -> vector<256x64xf32>
    %c0_15 = arith.constant 0 : index
    %c0_16 = arith.constant 0 : index
    %16 = vector.load %arg5[%c0_15, %c0_16] : memref<1x64xf32, #tpu.memory_space<vmem>>, vector<1x64xf32>
    %17 = vector.broadcast %16 : vector<1x64xf32> to vector<256x64xf32>
    %18 = arith.addf %15, %17 : vector<256x64xf32>
    %cst_17 = arith.constant 0.000000e+00 : f32
    %19 = vector.broadcast %cst_17 : f32 to vector<256x64xf32>
    %20 = arith.maximumf %18, %19 : vector<256x64xf32>
    %c0_18 = arith.constant 0 : index
    %c0_19 = arith.constant 0 : index
    %21 = vector.load %arg6[%c0_18, %c0_19] : memref<64x64xf32, #tpu.memory_space<vmem>>, vector<64x64xf32>
    %cst_20 = arith.constant dense<0.000000e+00> : vector<256x64xf32>
    %22 = tpu.matmul %20, %21, %cst_20 {dimension_numbers = #tpu.dot_dimension_numbers<[1], [0], [0], [1], [0, 0, 1, 1], [], []>} : vector<256x64xf32>, vector<64x64xf32>, vector<256x64xf32> -> vector<256x64xf32>
    %c0_21 = arith.constant 0 : index
    %c0_22 = arith.constant 0 : index
    %23 = vector.load %arg7[%c0_21, %c0_22] : memref<1x64xf32, #tpu.memory_space<vmem>>, vector<1x64xf32>
    %24 = vector.broadcast %23 : vector<1x64xf32> to vector<256x64xf32>
    %25 = arith.addf %22, %24 : vector<256x64xf32>
    %cst_23 = arith.constant 0.000000e+00 : f32
    %26 = vector.broadcast %cst_23 : f32 to vector<256x64xf32>
    %27 = arith.maximumf %25, %26 : vector<256x64xf32>
    %c0_24 = arith.constant 0 : index
    %c0_25 = arith.constant 0 : index
    %28 = vector.load %arg8[%c0_24, %c0_25] : memref<64x128xf32, #tpu.memory_space<vmem>>, vector<64x128xf32>
    %cst_26 = arith.constant dense<0.000000e+00> : vector<256x128xf32>
    %29 = tpu.matmul %27, %28, %cst_26 {dimension_numbers = #tpu.dot_dimension_numbers<[1], [0], [0], [1], [0, 0, 1, 1], [], []>} : vector<256x64xf32>, vector<64x128xf32>, vector<256x128xf32> -> vector<256x128xf32>
    %c0_27 = arith.constant 0 : index
    %c0_28 = arith.constant 0 : index
    %30 = vector.load %arg9[%c0_27, %c0_28] : memref<1x128xf32, #tpu.memory_space<vmem>>, vector<1x128xf32>
    %31 = vector.broadcast %30 : vector<1x128xf32> to vector<256x128xf32>
    %32 = arith.addf %29, %31 : vector<256x128xf32>
    %cst_29 = arith.constant 0.000000e+00 : f32
    %33 = vector.broadcast %cst_29 : f32 to vector<256x128xf32>
    %34 = arith.maximumf %32, %33 : vector<256x128xf32>
    %c0_30 = arith.constant 0 : index
    %c0_31 = arith.constant 0 : index
    %35 = vector.load %arg10[%c0_30, %c0_31] : memref<128x128xf32, #tpu.memory_space<vmem>>, vector<128x128xf32>
    %cst_32 = arith.constant dense<0.000000e+00> : vector<256x128xf32>
    %36 = tpu.matmul %34, %35, %cst_32 {dimension_numbers = #tpu.dot_dimension_numbers<[1], [0], [0], [1], [0, 0, 1, 1], [], []>} : vector<256x128xf32>, vector<128x128xf32>, vector<256x128xf32> -> vector<256x128xf32>
    %c0_33 = arith.constant 0 : index
    %c0_34 = arith.constant 0 : index
    %37 = vector.load %arg11[%c0_33, %c0_34] : memref<1x128xf32, #tpu.memory_space<vmem>>, vector<1x128xf32>
    %38 = vector.broadcast %37 : vector<1x128xf32> to vector<256x128xf32>
    %39 = arith.addf %36, %38 : vector<256x128xf32>
    %cst_35 = arith.constant 0.000000e+00 : f32
    %40 = vector.broadcast %cst_35 : f32 to vector<256x128xf32>
    %41 = arith.maximumf %39, %40 : vector<256x128xf32>
    %42 = vector.extract_strided_slice %41 {offsets = [0, 0], sizes = [128, 128], strides = [1, 1]} : vector<256x128xf32> to vector<128x128xf32>
    %cst_36 = arith.constant dense<0xFF800000> : vector<128xf32>
    %43 = vector.multi_reduction <maximumf>, %42, %cst_36 [0] : vector<128x128xf32> to vector<128xf32>
    %44 = vector.shape_cast %43 : vector<128xf32> to vector<1x128xf32>
    %45 = vector.extract_strided_slice %41 {offsets = [128, 0], sizes = [128, 128], strides = [1, 1]} : vector<256x128xf32> to vector<128x128xf32>
    %cst_37 = arith.constant dense<0xFF800000> : vector<128xf32>
    %46 = vector.multi_reduction <maximumf>, %45, %cst_37 [0] : vector<128x128xf32> to vector<128xf32>
    %47 = vector.shape_cast %46 : vector<128xf32> to vector<1x128xf32>
    %48 = tpu.concatenate %44, %47 in 0 : vector<1x128xf32>, vector<1x128xf32> -> vector<2x128xf32>
    %c0_38 = arith.constant 0 : index
    %c0_39 = arith.constant 0 : index
    %c0_40 = arith.constant 0 : index
    %49 = vector.load %arg12[%c0_38, %c0_39, %c0_40] : memref<1x2x128xf32, #tpu.memory_space<vmem>>, vector<1x2x128xf32>
    %50 = vector.shape_cast %49 : vector<1x2x128xf32> to vector<2x128xf32>
    %51 = vector.shape_cast %48 : vector<2x128xf32> to vector<1x2x128xf32>
    tpu.vector_store %arg12[%c0_38, %c0_39, %c0_40], %51 {strides = array<i32>} : memref<1x2x128xf32, #tpu.memory_space<vmem>>, vector<1x2x128xf32>,
    return
  }
  func.func @transform_0(%arg0: i32) -> (i32, i32, i32) {
    %c0_i32 = arith.constant 0 : i32
    %c0_i32_0 = arith.constant 0 : i32
    %c0_i32_1 = arith.constant 0 : i32
    return %arg0, %c0_i32, %c0_i32_0 : i32, i32, i32
  }
  func.func @transform_1(%arg0: i32) -> (i32, i32) {
    %c0_i32 = arith.constant 0 : i32
    %c0_i32_0 = arith.constant 0 : i32
    %c0_i32_1 = arith.constant 0 : i32
    return %c0_i32, %c0_i32_0 : i32, i32
  }
  func.func @transform_2(%arg0: i32) -> (i32, i32) {
    %c0_i32 = arith.constant 0 : i32
    %c0_i32_0 = arith.constant 0 : i32
    %c0_i32_1 = arith.constant 0 : i32
    return %c0_i32, %c0_i32_0 : i32, i32
  }
  func.func @transform_3(%arg0: i32) -> (i32, i32) {
    %c0_i32 = arith.constant 0 : i32
    %c0_i32_0 = arith.constant 0 : i32
    %c0_i32_1 = arith.constant 0 : i32
    return %c0_i32, %c0_i32_0 : i32, i32
  }
  func.func @transform_4(%arg0: i32) -> (i32, i32) {
    %c0_i32 = arith.constant 0 : i32
    %c0_i32_0 = arith.constant 0 : i32
    %c0_i32_1 = arith.constant 0 : i32
    return %c0_i32, %c0_i32_0 : i32, i32
  }
  func.func @transform_5(%arg0: i32) -> (i32, i32) {
    %c0_i32 = arith.constant 0 : i32
    %c0_i32_0 = arith.constant 0 : i32
    %c0_i32_1 = arith.constant 0 : i32
    return %c0_i32, %c0_i32_0 : i32, i32
  }
  func.func @transform_6(%arg0: i32) -> (i32, i32) {
    %c0_i32 = arith.constant 0 : i32
    %c0_i32_0 = arith.constant 0 : i32
    %c0_i32_1 = arith.constant 0 : i32
    return %c0_i32, %c0_i32_0 : i32, i32
  }
  func.func @transform_7(%arg0: i32) -> (i32, i32) {
    %c0_i32 = arith.constant 0 : i32
    %c0_i32_0 = arith.constant 0 : i32
    %c0_i32_1 = arith.constant 0 : i32
    return %c0_i32, %c0_i32_0 : i32, i32
  }
  func.func @transform_8(%arg0: i32) -> (i32, i32) {
    %c0_i32 = arith.constant 0 : i32
    %c0_i32_0 = arith.constant 0 : i32
    %c0_i32_1 = arith.constant 0 : i32
    return %c0_i32, %c0_i32_0 : i32, i32
  }
  func.func @transform_9(%arg0: i32) -> (i32, i32) {
    %c0_i32 = arith.constant 0 : i32
    %c0_i32_0 = arith.constant 0 : i32
    %c0_i32_1 = arith.constant 0 : i32
    return %c0_i32, %c0_i32_0 : i32, i32
  }
  func.func @transform_10(%arg0: i32) -> (i32, i32) {
    %c0_i32 = arith.constant 0 : i32
    %c0_i32_0 = arith.constant 0 : i32
    %c0_i32_1 = arith.constant 0 : i32
    return %c0_i32, %c0_i32_0 : i32, i32
  }
  func.func @transform_11(%arg0: i32) -> (i32, i32, i32) {
    %c0_i32 = arith.constant 0 : i32
    %c0_i32_0 = arith.constant 0 : i32
    %c0_i32_1 = arith.constant 0 : i32
    return %arg0, %c0_i32, %c0_i32_0 : i32, i32, i32
  }
}

</mosaic_0001>

<llo_original>
// kernel: tpu_custom_call.1
$region0: #{tpu_custom_call.1}
  #allocation0 [shape = 'u32[]', space=smem, size = 0x4, offset = 0x4, fixed_abs, tag = 'smem constant byte address 0x4 - core index']
  #allocation1 [shape = 'u32[144,128]{1,0:T(1,128)}', space=vmem, size = 0x12000, scoped, tag = 'internal scratch']
  %s0 = inlined_call_operand.vmem [shape: f32[8,3,128], index: 0, kind: input, shape index: {}]
  %s1 = inlined_call_operand.hbm [shape: f32[3,64], index: 1, kind: input, shape index: {}]
  %s2 = inlined_call_operand.vmem [shape: f32[1,64], index: 2, kind: input, shape index: {}]
  %s3 = inlined_call_operand.vmem [shape: f32[64,64], index: 3, kind: input, shape index: {}]
  %s4 = inlined_call_operand.vmem [shape: f32[1,64], index: 4, kind: input, shape index: {}]
  %s5 = inlined_call_operand.hbm [shape: f32[64,64], index: 5, kind: input, shape index: {}]
  %s6 = inlined_call_operand.vmem [shape: f32[1,64], index: 6, kind: input, shape index: {}]
  %s7 = inlined_call_operand.hbm [shape: f32[64,128], index: 7, kind: input, shape index: {}]
  %s8 = inlined_call_operand.vmem [shape: f32[1,128], index: 8, kind: input, shape index: {}]
  %s9 = inlined_call_operand.hbm [shape: f32[128,128], index: 9, kind: input, shape index: {}]
  %s10 = inlined_call_operand.vmem [shape: f32[1,128], index: 10, kind: input, shape index: {}]
  %s11 = inlined_call_operand.hbm [shape: f32[4,2,128], index: 11, kind: output, shape index: {}]
  %s12 = sld [smem:[#allocation0]]
  $region93: #{tpu_custom_call.1} parent=0
    _
  %s14 = ssub.s32 1, %s12
  %s15 = scalar_select 0, %s14, %s12
  $region1: #{tpu_custom_call.1} parent=0
    #allocation2 [shape = 'u8[2048]{0}', space=vmem, size = 0x800, scoped, tag = 'input window, operand 1, single buffered']
    #allocation3 [shape = 's32[2]{0}', space=sflag, size = 0x8, scoped, tag = 'scoped memory for tpu_custom_call.1']
    #allocation4 [shape = 's32[2]{0}', space=sflag, size = 0x8, scoped, tag = 'scoped memory for tpu_custom_call.1']
    #allocation5 [shape = 'u8[32768]{0}', space=vmem, size = 0x8000, scoped, tag = 'input window, operand 5, single buffered']
    #allocation6 [shape = 's32[1]{0}', space=sflag, size = 0x4, scoped, tag = 'scoped memory for tpu_custom_call.1']
    #allocation7 [shape = 'u8[32768]{0}', space=vmem, size = 0x8000, scoped, tag = 'input window, operand 7, single buffered']
    #allocation8 [shape = 'u8[65536]{0}', space=vmem, size = 0x10000, scoped, tag = 'input window, operand 9, single buffered']
    #allocation9 [shape = 's32[1]{0}', space=sflag, size = 0x4, scoped, tag = 'scoped memory for tpu_custom_call.1']
    #allocation10 [shape = 'u8[2048]{0}', space=vmem, size = 0x800, scoped, tag = 'output window, operand 0']
    %16 = vsyncpa [#allocation3], 0
    %17 = vsyncpa [#allocation6], 0
    %18 = vsyncpa [#allocation9], 0
    %19 = vsyncpa [#allocation4], 0
    %s20 = scalar_lea.sflag [#allocation4], 1
    %21 = vsyncpa %s20, 0
    loop: start=0, step=1, limit=6
    $region2: #{tpu_custom_call.1} parent=1 // loop_pre_header
      _
    $region3: #{tpu_custom_call.1} parent=1 // loop_header
      %s23 = sphi 0, %s27
      %p24 = scmp.ge.s32.totalorder %s23, 6
      %s33 = sphi 0, %s35
      %s36 = sphi 0, %s33
      %s37 = sphi 0, %s36
      %s53 = sphi 0, %s37
      %s57 = sphi 0, %s57
      %s59 = sphi 0, %s57
      %s60 = sphi 0, %s59
      %s74 = sphi 0, %s60
      %s78 = sphi 0, %s78
      %s80 = sphi 0, %s78
      %s81 = sphi 0, %s80
      %s95 = sphi 0, %s81
      %s99 = sphi 0, %s99
      %s101 = sphi 0, %s99
      %s102 = sphi 0, %s101
      %s116 = sphi 0, %s102
      %s120 = sphi 0, %s120
      %s122 = sphi 0, %s120
      %s123 = sphi 0, %s122
      %s137 = sphi 0, %s123
      %s141 = sphi 0, %s141
      %s143 = sphi 0, %s141
      %s144 = sphi 0, %s143
      %s158 = sphi 0, %s144
      %s162 = sphi 0, %s162
      %s164 = sphi 0, %s162
      %s165 = sphi 0, %s164
      %s179 = sphi 0, %s165
      %s183 = sphi 0, %s183
      %s185 = sphi 0, %s183
      %s186 = sphi 0, %s185
      %s200 = sphi 0, %s186
      %s204 = sphi 0, %s204
      %s206 = sphi 0, %s204
      %s207 = sphi 0, %s206
      %s221 = sphi 0, %s207
      %s225 = sphi 0, %s225
      %s227 = sphi 0, %s225
      %s228 = sphi 0, %s227
      %s242 = sphi 0, %s228
      %s246 = sphi 0, %s246
      %s248 = sphi 0, %s246
      %s249 = sphi 0, %s248
      %s263 = sphi 0, %s249
      %s269 = sphi 0, %s271
      %s272 = sphi 0, %s269
      %s273 = sphi 0, %s272
      %s289 = sphi 0, %s273
    $region4: #{tpu_custom_call.1} parent=1 // loop_header_branch
      %26 = sbr.rel (%p24) target = $region8
    $region5: #{tpu_custom_call.1} parent=1 // loop_body
      %s28 = ssub.s32 %s23, 1
      %s29 = ssub.s32 %s23, 2
      %s30 = sadd.s32 %s23, 1
      %s31 = ssub.s32 %s23, %s30
      %p32 = scmp.eq.s32.totalorder %s31, 0
      %s34 = sadd.s32 %s33, 1
      %s35 = scalar_select %p32, %s33, %s34
      %p38 = pneg %p32
      %p39 = scmp.eq.s32.totalorder %s23, 3
      %p40 = por %p38, %p39
      %p41 = scmp.ne.s32.totalorder %s33, %s36
      %p42 = scmp.eq.s32.totalorder %s23, 0
      %p43 = por %p41, %p42
      %p44 = scmp.ne.s32.totalorder %s33, %s36
      %p45 = scmp.eq.s32.totalorder %s28, 3
      %p46 = por %p44, %p45
      %p47 = scmp.ne.s32.totalorder %s36, %s37
      %p48 = scmp.eq.s32.totalorder %s28, 0
      %p49 = por %p47, %p48
      %p50 = scmp.ne.s32.totalorder %s36, %s37
      %p51 = scmp.eq.s32.totalorder %s29, 3
      %p52 = por %p50, %p51
      %p54 = scmp.ne.s32.totalorder %s37, %s53
      %p55 = scmp.eq.s32.totalorder %s29, 0
      %p56 = por %p54, %p55
      %s58 = sadd.s32 %s57, 1
      %p61 = scmp.eq.s32.totalorder %s23, 3
      %p62 = scmp.ne.s32.totalorder %s57, %s59
      %p63 = scmp.eq.s32.totalorder %s23, 0
      %p64 = por %p62, %p63
      %p65 = scmp.ne.s32.totalorder %s57, %s59
      %p66 = scmp.eq.s32.totalorder %s28, 3
      %p67 = por %p65, %p66
      %p68 = scmp.ne.s32.totalorder %s59, %s60
      %p69 = scmp.eq.s32.totalorder %s28, 0
      %p70 = por %p68, %p69
      %p71 = scmp.ne.s32.totalorder %s59, %s60
      %p72 = scmp.eq.s32.totalorder %s29, 3
      %p73 = por %p71, %p72
      %p75 = scmp.ne.s32.totalorder %s60, %s74
      %p76 = scmp.eq.s32.totalorder %s29, 0
      %p77 = por %p75, %p76
      %s79 = sadd.s32 %s78, 1
      %p82 = scmp.eq.s32.totalorder %s23, 3
      %p83 = scmp.ne.s32.totalorder %s78, %s80
      %p84 = scmp.eq.s32.totalorder %s23, 0
      %p85 = por %p83, %p84
      %p86 = scmp.ne.s32.totalorder %s78, %s80
      %p87 = scmp.eq.s32.totalorder %s28, 3
      %p88 = por %p86, %p87
      %p89 = scmp.ne.s32.totalorder %s80, %s81
      %p90 = scmp.eq.s32.totalorder %s28, 0
      %p91 = por %p89, %p90
      %p92 = scmp.ne.s32.totalorder %s80, %s81
      %p93 = scmp.eq.s32.totalorder %s29, 3
      %p94 = por %p92, %p93
      %p96 = scmp.ne.s32.totalorder %s81, %s95
      %p97 = scmp.eq.s32.totalorder %s29, 0
      %p98 = por %p96, %p97
      %s100 = sadd.s32 %s99, 1
      %p103 = scmp.eq.s32.totalorder %s23, 3
      %p104 = scmp.ne.s32.totalorder %s99, %s101
      %p105 = scmp.eq.s32.totalorder %s23, 0
      %p106 = por %p104, %p105
      %p107 = scmp.ne.s32.totalorder %s99, %s101
      %p108 = scmp.eq.s32.totalorder %s28, 3
      %p109 = por %p107, %p108
      %p110 = scmp.ne.s32.totalorder %s101, %s102
      %p111 = scmp.eq.s32.totalorder %s28, 0
      %p112 = por %p110, %p111
      %p113 = scmp.ne.s32.totalorder %s101, %s102
      %p114 = scmp.eq.s32.totalorder %s29, 3
      %p115 = por %p113, %p114
      %p117 = scmp.ne.s32.totalorder %s102, %s116
      %p118 = scmp.eq.s32.totalorder %s29, 0
      %p119 = por %p117, %p118
      %s121 = sadd.s32 %s120, 1
      %p124 = scmp.eq.s32.totalorder %s23, 3
      %p125 = scmp.ne.s32.totalorder %s120, %s122
      %p126 = scmp.eq.s32.totalorder %s23, 0
      %p127 = por %p125, %p126
      %p128 = scmp.ne.s32.totalorder %s120, %s122
      %p129 = scmp.eq.s32.totalorder %s28, 3
      %p130 = por %p128, %p129
      %p131 = scmp.ne.s32.totalorder %s122, %s123
      %p132 = scmp.eq.s32.totalorder %s28, 0
      %p133 = por %p131, %p132
      %p134 = scmp.ne.s32.totalorder %s122, %s123
      %p135 = scmp.eq.s32.totalorder %s29, 3
      %p136 = por %p134, %p135
      %p138 = scmp.ne.s32.totalorder %s123, %s137
      %p139 = scmp.eq.s32.totalorder %s29, 0
      %p140 = por %p138, %p139
      %s142 = sadd.s32 %s141, 1
      %p145 = scmp.eq.s32.totalorder %s23, 3
      %p146 = scmp.ne.s32.totalorder %s141, %s143
      %p147 = scmp.eq.s32.totalorder %s23, 0
      %p148 = por %p146, %p147
      %p149 = scmp.ne.s32.totalorder %s141, %s143
      %p150 = scmp.eq.s32.totalorder %s28, 3
      %p151 = por %p149, %p150
      %p152 = scmp.ne.s32.totalorder %s143, %s144
      %p153 = scmp.eq.s32.totalorder %s28, 0
      %p154 = por %p152, %p153
      %p155 = scmp.ne.s32.totalorder %s143, %s144
      %p156 = scmp.eq.s32.totalorder %s29, 3
      %p157 = por %p155, %p156
      %p159 = scmp.ne.s32.totalorder %s144, %s158
      %p160 = scmp.eq.s32.totalorder %s29, 0
      %p161 = por %p159, %p160
      %s163 = sadd.s32 %s162, 1
      %p166 = scmp.eq.s32.totalorder %s23, 3
      %p167 = scmp.ne.s32.totalorder %s162, %s164
      %p168 = scmp.eq.s32.totalorder %s23, 0
      %p169 = por %p167, %p168
      %p170 = scmp.ne.s32.totalorder %s162, %s164
      %p171 = scmp.eq.s32.totalorder %s28, 3
      %p172 = por %p170, %p171
      %p173 = scmp.ne.s32.totalorder %s164, %s165
      %p174 = scmp.eq.s32.totalorder %s28, 0
      %p175 = por %p173, %p174
      %p176 = scmp.ne.s32.totalorder %s164, %s165
      %p177 = scmp.eq.s32.totalorder %s29, 3
      %p178 = por %p176, %p177
      %p180 = scmp.ne.s32.totalorder %s165, %s179
      %p181 = scmp.eq.s32.totalorder %s29, 0
      %p182 = por %p180, %p181
      %s184 = sadd.s32 %s183, 1
      %p187 = scmp.eq.s32.totalorder %s23, 3
      %p188 = scmp.ne.s32.totalorder %s183, %s185
      %p189 = scmp.eq.s32.totalorder %s23, 0
      %p190 = por %p188, %p189
      %p191 = scmp.ne.s32.totalorder %s183, %s185
      %p192 = scmp.eq.s32.totalorder %s28, 3
      %p193 = por %p191, %p192
      %p194 = scmp.ne.s32.totalorder %s185, %s186
      %p195 = scmp.eq.s32.totalorder %s28, 0
      %p196 = por %p194, %p195
      %p197 = scmp.ne.s32.totalorder %s185, %s186
      %p198 = scmp.eq.s32.totalorder %s29, 3
      %p199 = por %p197, %p198
      %p201 = scmp.ne.s32.totalorder %s186, %s200
      %p202 = scmp.eq.s32.totalorder %s29, 0
      %p203 = por %p201, %p202
      %s205 = sadd.s32 %s204, 1
      %p208 = scmp.eq.s32.totalorder %s23, 3
      %p209 = scmp.ne.s32.totalorder %s204, %s206
      %p210 = scmp.eq.s32.totalorder %s23, 0
      %p211 = por %p209, %p210
      %p212 = scmp.ne.s32.totalorder %s204, %s206
      %p213 = scmp.eq.s32.totalorder %s28, 3
      %p214 = por %p212, %p213
      %p215 = scmp.ne.s32.totalorder %s206, %s207
      %p216 = scmp.eq.s32.totalorder %s28, 0
      %p217 = por %p215, %p216
      %p218 = scmp.ne.s32.totalorder %s206, %s207
      %p219 = scmp.eq.s32.totalorder %s29, 3
      %p220 = por %p218, %p219
      %p222 = scmp.ne.s32.totalorder %s207, %s221
      %p223 = scmp.eq.s32.totalorder %s29, 0
      %p224 = por %p222, %p223
      %s226 = sadd.s32 %s225, 1
      %p229 = scmp.eq.s32.totalorder %s23, 3
      %p230 = scmp.ne.s32.totalorder %s225, %s227
      %p231 = scmp.eq.s32.totalorder %s23, 0
      %p232 = por %p230, %p231
      %p233 = scmp.ne.s32.totalorder %s225, %s227
      %p234 = scmp.eq.s32.totalorder %s28, 3
      %p235 = por %p233, %p234
      %p236 = scmp.ne.s32.totalorder %s227, %s228
      %p237 = scmp.eq.s32.totalorder %s28, 0
      %p238 = por %p236, %p237
      %p239 = scmp.ne.s32.totalorder %s227, %s228
      %p240 = scmp.eq.s32.totalorder %s29, 3
      %p241 = por %p239, %p240
      %p243 = scmp.ne.s32.totalorder %s228, %s242
      %p244 = scmp.eq.s32.totalorder %s29, 0
      %p245 = por %p243, %p244
      %s247 = sadd.s32 %s246, 1
      %p250 = scmp.eq.s32.totalorder %s23, 3
      %p251 = scmp.ne.s32.totalorder %s246, %s248
      %p252 = scmp.eq.s32.totalorder %s23, 0
      %p253 = por %p251, %p252
      %p254 = scmp.ne.s32.totalorder %s246, %s248
      %p255 = scmp.eq.s32.totalorder %s28, 3
      %p256 = por %p254, %p255
      %p257 = scmp.ne.s32.totalorder %s248, %s249
      %p258 = scmp.eq.s32.totalorder %s28, 0
      %p259 = por %p257, %p258
      %p260 = scmp.ne.s32.totalorder %s248, %s249
      %p261 = scmp.eq.s32.totalorder %s29, 3
      %p262 = por %p260, %p261
      %p264 = scmp.ne.s32.totalorder %s249, %s263
      %p265 = scmp.eq.s32.totalorder %s29, 0
      %p266 = por %p264, %p265
      %s267 = ssub.s32 %s23, %s30
      %p268 = scmp.eq.s32.totalorder %s267, 0
      %s270 = sadd.s32 %s269, 1
      %s271 = scalar_select %p268, %s269, %s270
      %p274 = pneg %p268
      %p275 = scmp.eq.s32.totalorder %s23, 3
      %p276 = por %p274, %p275
      %p277 = scmp.ne.s32.totalorder %s269, %s272
      %p278 = scmp.eq.s32.totalorder %s23, 0
      %p279 = por %p277, %p278
      %p280 = scmp.ne.s32.totalorder %s269, %s272
      %p281 = scmp.eq.s32.totalorder %s28, 3
      %p282 = por %p280, %p281
      %p283 = scmp.ne.s32.totalorder %s272, %s273
      %p284 = scmp.eq.s32.totalorder %s28, 0
      %p285 = por %p283, %p284
      %p286 = scmp.ne.s32.totalorder %s272, %s273
      %p287 = scmp.eq.s32.totalorder %s29, 3
      %p288 = por %p286, %p287
      %p290 = scmp.ne.s32.totalorder %s273, %s289
      %p291 = scmp.eq.s32.totalorder %s29, 0
      %p292 = por %p290, %p291
      %p293 = scmp.le.s32.totalorder 1, %s23
      %p294 = scmp.lt.s32.totalorder %s23, 5
      %p295 = pnand %p293, %p294
      %p296 = pneg %p295
      // Predicated region
      $region9: #{tpu_custom_call.1} parent=5 // pred_check
        _
      $region10: #{tpu_custom_call.1} parent=5 // pred_check_branch
        %298 = sbr.rel (%p295) target = $region12
      $region11: #{tpu_custom_call.1} parent=5 // pred_region
        %s299 = ssub.s32 %s23, 1
        // Predicated region
        $region13: #{tpu_custom_call.1} parent=11 // pred_check
          %p300 = pneg %p70
        $region14: #{tpu_custom_call.1} parent=11 // pred_check_branch
          %302 = sbr.rel (%p300) target = $region16
        $region15: #{tpu_custom_call.1} parent=11 // pred_region
          %s304 = ssub.s32 64, 64
          %305 = vsyncadd [#allocation3], %s304
          %s307 = sshll.u32 [#allocation2], 4
          %s308 = int_to_ptr.vmem [resolvable:$true] %s307
          %310 = dma.hbm_to_vmem [thread:$0]  %s1, 64, %s308, [#allocation3]
        $region16: #{tpu_custom_call.1} parent=11 // pred_fallthru
          _
        // Predicated region
        $region17: #{tpu_custom_call.1} parent=11 // pred_check
          %p311 = pneg %p91
        $region18: #{tpu_custom_call.1} parent=11 // pred_check_branch
          %313 = sbr.rel (%p311) target = $region20
        $region19: #{tpu_custom_call.1} parent=11 // pred_region
          _
        $region20: #{tpu_custom_call.1} parent=11 // pred_fallthru
          _
        // Predicated region
        $region21: #{tpu_custom_call.1} parent=11 // pred_check
          %p314 = pneg %p112
        $region22: #{tpu_custom_call.1} parent=11 // pred_check_branch
          %316 = sbr.rel (%p314) target = $region24
        $region23: #{tpu_custom_call.1} parent=11 // pred_region
          _
        $region24: #{tpu_custom_call.1} parent=11 // pred_fallthru
          _
        // Predicated region
        $region25: #{tpu_custom_call.1} parent=11 // pred_check
          %p317 = pneg %p133
        $region26: #{tpu_custom_call.1} parent=11 // pred_check_branch
          %319 = sbr.rel (%p317) target = $region28
        $region27: #{tpu_custom_call.1} parent=11 // pred_region
          _
        $region28: #{tpu_custom_call.1} parent=11 // pred_fallthru
          _
        // Predicated region
        $region29: #{tpu_custom_call.1} parent=11 // pred_check
          %p320 = pneg %p154
        $region30: #{tpu_custom_call.1} parent=11 // pred_check_branch
          %322 = sbr.rel (%p320) target = $region32
        $region31: #{tpu_custom_call.1} parent=11 // pred_region
          %s324 = ssub.s32 1024, 1024
          %325 = vsyncadd [#allocation6], %s324
          %s326 = sshll.u32 [#allocation5], 4
          %s327 = int_to_ptr.vmem [resolvable:$true] %s326
          %332 = dma.hbm_to_vmem [thread:$0]  %s5, 1024, %s327, [#allocation6], 128, 128, 8
        $region32: #{tpu_custom_call.1} parent=11 // pred_fallthru
          _
        // Predicated region
        $region33: #{tpu_custom_call.1} parent=11 // pred_check
          %p333 = pneg %p175
        $region34: #{tpu_custom_call.1} parent=11 // pred_check_branch
          %335 = sbr.rel (%p333) target = $region36
        $region35: #{tpu_custom_call.1} parent=11 // pred_region
          _
        $region36: #{tpu_custom_call.1} parent=11 // pred_fallthru
          _
        // Predicated region
        $region37: #{tpu_custom_call.1} parent=11 // pred_check
          %p336 = pneg %p196
        $region38: #{tpu_custom_call.1} parent=11 // pred_check_branch
          %338 = sbr.rel (%p336) target = $region40
        $region39: #{tpu_custom_call.1} parent=11 // pred_region
          %s340 = ssub.s32 1024, 1024
          %341 = vsyncadd [#allocation6], %s340
          %s342 = sshll.u32 [#allocation7], 4
          %s343 = int_to_ptr.vmem [resolvable:$true] %s342
          %348 = dma.hbm_to_vmem [thread:$0]  %s7, 1024, %s343, [#allocation6], 128, 128, 8
        $region40: #{tpu_custom_call.1} parent=11 // pred_fallthru
          _
        // Predicated region
        $region41: #{tpu_custom_call.1} parent=11 // pred_check
          %p349 = pneg %p217
        $region42: #{tpu_custom_call.1} parent=11 // pred_check_branch
          %351 = sbr.rel (%p349) target = $region44
        $region43: #{tpu_custom_call.1} parent=11 // pred_region
          _
        $region44: #{tpu_custom_call.1} parent=11 // pred_fallthru
          _
        // Predicated region
        $region45: #{tpu_custom_call.1} parent=11 // pred_check
          %p352 = pneg %p238
        $region46: #{tpu_custom_call.1} parent=11 // pred_check_branch
          %354 = sbr.rel (%p352) target = $region48
        $region47: #{tpu_custom_call.1} parent=11 // pred_region
          %s356 = ssub.s32 2048, 2048
          %357 = vsyncadd [#allocation9], %s356
          %s358 = sshll.u32 [#allocation8], 4
          %s359 = int_to_ptr.vmem [resolvable:$true] %s358
          %364 = dma.hbm_to_vmem [thread:$0]  %s9, 2048, %s359, [#allocation9], 128, 128, 8
        $region48: #{tpu_custom_call.1} parent=11 // pred_fallthru
          _
        // Predicated region
        $region49: #{tpu_custom_call.1} parent=11 // pred_check
          %p365 = pneg %p259
        $region50: #{tpu_custom_call.1} parent=11 // pred_check_branch
          %367 = sbr.rel (%p365) target = $region52
        $region51: #{tpu_custom_call.1} parent=11 // pred_region
          _
        $region52: #{tpu_custom_call.1} parent=11 // pred_fallthru
          _
      $region12: #{tpu_custom_call.1} parent=5 // pred_fallthru
        _
      %p368 = scmp.lt.s32.totalorder %s23, 4
      // Predicated region
      $region53: #{tpu_custom_call.1} parent=5 // pred_check
        %p369 = pneg %p368
      $region54: #{tpu_custom_call.1} parent=5 // pred_check_branch
        %371 = sbr.rel (%p369) target = $region56
      $region55: #{tpu_custom_call.1} parent=5 // pred_region
        // Predicated region
        $region57: #{tpu_custom_call.1} parent=55 // pred_check
          %p372 = pneg %p43
        $region58: #{tpu_custom_call.1} parent=55 // pred_check_branch
          %374 = sbr.rel (%p372) target = $region60
        $region59: #{tpu_custom_call.1} parent=55 // pred_region
          %s375 = smul.u32 2, %s23
          %p376 = scmp.lt.s32.totalorder %s375, 7
          %s377 = scalar_select %p376, %s375, 7
          %s378 = smul.addr %s377, 4
          %s379 = scalar_lea.vmem %s0, %s378
          %s380 = smul.u32 2, %s23
        $region60: #{tpu_custom_call.1} parent=55 // pred_fallthru
          _
      $region56: #{tpu_custom_call.1} parent=5 // pred_fallthru
        _
      %p381 = scmp.le.s32.totalorder 1, %s23
      %p382 = scmp.lt.s32.totalorder %s23, 5
      %p383 = pnand %p381, %p382
      %p384 = pneg %p383
      // Predicated region
      $region61: #{tpu_custom_call.1} parent=5 // pred_check
        _
      $region62: #{tpu_custom_call.1} parent=5 // pred_check_branch
        %386 = sbr.rel (%p383) target = $region64
      $region63: #{tpu_custom_call.1} parent=5 // pred_region
        %s387 = ssub.s32 %s23, 1
        // Predicated region
        $region65: #{tpu_custom_call.1} parent=63 // pred_check
          %p388 = pneg %p70
        $region66: #{tpu_custom_call.1} parent=63 // pred_check_branch
          %390 = sbr.rel (%p388) target = $region68
        $region67: #{tpu_custom_call.1} parent=63 // pred_region
          %391 = dma.done [#allocation3], 64
        $region68: #{tpu_custom_call.1} parent=63 // pred_fallthru
          _
        // Predicated region
        $region69: #{tpu_custom_call.1} parent=63 // pred_check
          %p392 = pneg %p154
        $region70: #{tpu_custom_call.1} parent=63 // pred_check_branch
          %394 = sbr.rel (%p392) target = $region72
        $region71: #{tpu_custom_call.1} parent=63 // pred_region
          %395 = dma.done [#allocation6], 1024
        $region72: #{tpu_custom_call.1} parent=63 // pred_fallthru
          _
        // Predicated region
        $region73: #{tpu_custom_call.1} parent=63 // pred_check
          %p396 = pneg %p196
        $region74: #{tpu_custom_call.1} parent=63 // pred_check_branch
          %398 = sbr.rel (%p396) target = $region76
        $region75: #{tpu_custom_call.1} parent=63 // pred_region
          %399 = dma.done [#allocation6], 1024
        $region76: #{tpu_custom_call.1} parent=63 // pred_fallthru
          _
        // Predicated region
        $region77: #{tpu_custom_call.1} parent=63 // pred_check
          %p400 = pneg %p238
        $region78: #{tpu_custom_call.1} parent=63 // pred_check_branch
          %402 = sbr.rel (%p400) target = $region80
        $region79: #{tpu_custom_call.1} parent=63 // pred_region
          %403 = dma.done [#allocation9], 2048
        $region80: #{tpu_custom_call.1} parent=63 // pred_fallthru
          _
        %s404 = smul.u32 2, %s28
        %p405 = scmp.lt.s32.totalorder %s404, 7
        %s406 = scalar_select %p405, %s404, 7
        %s407 = smul.addr %s406, 4
        %s408 = scalar_lea.vmem %s0, %s407
        %p409 = pneg %p49
        %p410 = pneg %p46
        %p411 = pneg %p70
        %p412 = pneg %p67
        %p413 = pneg %p91
        %p414 = pneg %p88
        %p415 = pneg %p112
        %p416 = pneg %p109
        %p417 = pneg %p133
        %p418 = pneg %p130
        %p419 = pneg %p154
        %p420 = pneg %p151
        %p421 = pneg %p175
        %p422 = pneg %p172
        %p423 = pneg %p196
        %p424 = pneg %p193
        %p425 = pneg %p217
        %p426 = pneg %p214
        %p427 = pneg %p238
        %p428 = pneg %p235
        %p429 = pneg %p259
        %p430 = pneg %p256
        %p431 = pneg %p285
        %p432 = pneg %p282
        %s433 = sand.u32 %s272, 1
        %s434 = scalar_lea.sflag [#allocation4], %s433
        %s435 = sand.u32 %s272, 1
        %s436 = smul.addr %s435, 2
        %s437 = scalar_lea.vmem [#allocation10], %s436
        %s438 = smul.u32 2, %s28
        %p439 = scmp.lt.s32.totalorder %s438, 7
        %s440 = scalar_select %p439, %s438, 7
        %s441 = smul.addr %s440, 4
        %s442 = scalar_lea.vmem %s0, %s441
        %s443 = smul.u32 2, %s28
        %v444 = vld [vmem:[%s442] sm:$0x7]
        %v445 = vld [vmem:[#allocation2] sm:$0x7]
        %446 = vxpose.xlu0.b32.start [1/16] %v444, 128
        %447 = vxpose.xlu0.b32.cont [2/16] 0.0, 128
        %448 = vxpose.xlu0.b32.cont [3/16] 0.0, 128
        %449 = vxpose.xlu0.b32.cont [4/16] 0.0, 128
        %450 = vxpose.xlu0.b32.cont [5/16] 0.0, 128
        %451 = vxpose.xlu0.b32.cont [6/16] 0.0, 128
        %452 = vxpose.xlu0.b32.cont [7/16] 0.0, 128
        %453 = vxpose.xlu0.b32.cont [8/16] 0.0, 128
        %454 = vxpose.xlu0.b32.cont [9/16] 0.0, 128
        %455 = vxpose.xlu0.b32.cont [10/16] 0.0, 128
        %456 = vxpose.xlu0.b32.cont [11/16] 0.0, 128
        %457 = vxpose.xlu0.b32.cont [12/16] 0.0, 128
        %458 = vxpose.xlu0.b32.cont [13/16] 0.0, 128
        %459 = vxpose.xlu0.b32.cont [14/16] 0.0, 128
        %460 = vxpose.xlu0.b32.cont [15/16] 0.0, 128
        %461 = vxpose.xlu0.b32.end [16/16] 0.0, 128
        %v462 = vpop.trf.xlu0
        %v463 = vpop.trf.xlu0
        %v464 = vpop.trf.xlu0
        %v465 = vpop.trf.xlu0
        %v466 = vpop.trf.xlu0
        %v467 = vpop.trf.xlu0
        %v468 = vpop.trf.xlu0
        %v469 = vpop.trf.xlu0
        %v470 = vpop.trf.xlu0
        %v471 = vpop.trf.xlu0
        %v472 = vpop.trf.xlu0
        %v473 = vpop.trf.xlu0
        %v474 = vpop.trf.xlu0
        %v475 = vpop.trf.xlu0
        %v476 = vpop.trf.xlu0
        %v477 = vpop.trf.xlu0
        %vm478 = vcmask 23552
        %v480 = vsel %vm478, %v462, 0
        %v483 = vsel %vm478, %v463, 0
        %v486 = vsel %vm478, %v464, 0
        %v489 = vsel %vm478, %v465, 0
        %v492 = vsel %vm478, %v466, 0
        %v495 = vsel %vm478, %v467, 0
        %v498 = vsel %vm478, %v468, 0
        %v501 = vsel %vm478, %v469, 0
        %v504 = vsel %vm478, %v470, 0
        %v507 = vsel %vm478, %v471, 0
        %v510 = vsel %vm478, %v472, 0
        %v513 = vsel %vm478, %v473, 0
        %v516 = vsel %vm478, %v474, 0
        %v519 = vsel %vm478, %v475, 0
        %v522 = vsel %vm478, %v476, 0
        %v525 = vsel %vm478, %v477, 0
        %vm527 = vcmask 1042432
        %v529 = vsel %vm527, %v445, 0
        %531 = vmatprep.subr.mxu0 0.0
        %532 = vmatpush1.msra.mxu0 %v529
        %533 = vmatprep.subr.mxu0 0.0
        %534 = vmatpush1.msra.mxu0 0.0
        %535 = vmatprep.subr.mxu0 0.0
        %536 = vmatpush1.msra.mxu0 0.0
        %537 = vmatprep.subr.mxu0 0.0
        %538 = vmatpush1.msra.mxu0 0.0
        %539 = vmatprep.subr.mxu0 0.0
        %540 = vmatpush1.msra.mxu0 0.0
        %541 = vmatprep.subr.mxu0 0.0
        %542 = vmatpush1.msra.mxu0 0.0
        %543 = vmatprep.subr.mxu0 0.0
        %544 = vmatpush1.msra.mxu0 0.0
        %545 = vmatprep.subr.mxu0 0.0
        %546 = vmatpush1.msra.mxu0 0.0
        %547 = vmatprep.subr.mxu0 0.0
        %548 = vmatpush1.msra.mxu0 0.0
        %549 = vmatprep.subr.mxu0 0.0
        %550 = vmatpush1.msra.mxu0 0.0
        %551 = vmatprep.subr.mxu0 0.0
        %552 = vmatpush1.msra.mxu0 0.0
        %553 = vmatprep.subr.mxu0 0.0
        %554 = vmatpush1.msra.mxu0 0.0
        %555 = vmatprep.subr.mxu0 0.0
        %556 = vmatpush1.msra.mxu0 0.0
        %557 = vmatprep.subr.mxu0 0.0
        %558 = vmatpush1.msra.mxu0 0.0
        %559 = vmatprep.subr.mxu0 0.0
        %560 = vmatpush1.msra.mxu0 0.0
        %561 = vmatprep.subr.mxu0 0.0
        %562 = vmatpush1.msra.mxu0 0.0
        %563 = vmatprep.subr.mxu0 0.0
        %564 = vmatpush1.msra.mxu0 0.0
        %565 = vmatprep.subr.mxu0 0.0
        %566 = vmatpush1.msra.mxu0 0.0
        %567 = vmatprep.subr.mxu0 0.0
        %568 = vmatpush1.msra.mxu0 0.0
        %569 = vmatprep.subr.mxu0 0.0
        %570 = vmatpush1.msra.mxu0 0.0
        %571 = vmatprep.subr.mxu0 0.0
        %572 = vmatpush1.msra.mxu0 0.0
        %573 = vmatprep.subr.mxu0 0.0
        %574 = vmatpush1.msra.mxu0 0.0
        %575 = vmatprep.subr.mxu0 0.0
        %576 = vmatpush1.msra.mxu0 0.0
        %577 = vmatprep.subr.mxu0 0.0
        %578 = vmatpush1.msra.mxu0 0.0
        %579 = vmatprep.subr.mxu0 0.0
        %580 = vmatpush1.msra.mxu0 0.0
        %581 = vmatprep.subr.mxu0 0.0
        %582 = vmatpush1.msra.mxu0 0.0
        %583 = vmatprep.subr.mxu0 0.0
        %584 = vmatpush1.msra.mxu0 0.0
        %585 = vmatprep.subr.mxu0 0.0
        %586 = vmatpush1.msra.mxu0 0.0
        %587 = vmatprep.subr.mxu0 0.0
        %588 = vmatpush1.msra.mxu0 0.0
        %589 = vmatprep.subr.mxu0 0.0
        %590 = vmatpush1.msra.mxu0 0.0
        %591 = vmatprep.subr.mxu0 0.0
        %592 = vmatpush1.msra.mxu0 0.0
        %593 = vmatprep.subr.mxu0 0.0
        %594 = vmatpush1.msra.mxu0 0.0
        %595 = vmatprep.mubr.f32.mxu0 0.0
        %596 = vmatmul.mubr.f32.gmra.mrb[0].mxu0 %v480
        %v597 = vpop.f32.mrb[0].mxu0
        %v598 = vadd.f32 0.0, %v597
        %v599 = vpop.f32.mrb[0].mxu0
        %600 = vmatprep.mubr.f32.mxu0 0.0
        %601 = vmatmul.mubr.f32.gmra.mrb[0].mxu0 %v483
        %v602 = vpop.f32.mrb[0].mxu0
        %v603 = vadd.f32 0.0, %v602
        %v604 = vpop.f32.mrb[0].mxu0
        %605 = vmatprep.mubr.f32.mxu0 0.0
        %606 = vmatmul.mubr.f32.gmra.mrb[0].mxu0 %v486
        %v607 = vpop.f32.mrb[0].mxu0
        %v608 = vadd.f32 0.0, %v607
        %v609 = vpop.f32.mrb[0].mxu0
        %610 = vmatprep.mubr.f32.mxu0 0.0
        %611 = vmatmul.mubr.f32.gmra.mrb[0].mxu0 %v489
        %v612 = vpop.f32.mrb[0].mxu0
        %v613 = vadd.f32 0.0, %v612
        %v614 = vpop.f32.mrb[0].mxu0
        %615 = vmatprep.mubr.f32.mxu0 0.0
        %616 = vmatmul.mubr.f32.gmra.mrb[0].mxu0 %v492
        %v617 = vpop.f32.mrb[0].mxu0
        %v618 = vadd.f32 0.0, %v617
        %v619 = vpop.f32.mrb[0].mxu0
        %620 = vmatprep.mubr.f32.mxu0 0.0
        %621 = vmatmul.mubr.f32.gmra.mrb[0].mxu0 %v495
        %v622 = vpop.f32.mrb[0].mxu0
        %v623 = vadd.f32 0.0, %v622
        %v624 = vpop.f32.mrb[0].mxu0
        %625 = vmatprep.mubr.f32.mxu0 0.0
        %626 = vmatmul.mubr.f32.gmra.mrb[0].mxu0 %v498
        %v627 = vpop.f32.mrb[0].mxu0
        %v628 = vadd.f32 0.0, %v627
        %v629 = vpop.f32.mrb[0].mxu0
        %630 = vmatprep.mubr.f32.mxu0 0.0
        %631 = vmatmul.mubr.f32.gmra.mrb[0].mxu0 %v501
        %v632 = vpop.f32.mrb[0].mxu0
        %v633 = vadd.f32 0.0, %v632
        %v634 = vpop.f32.mrb[0].mxu0
        %635 = vmatprep.mubr.f32.mxu0 0.0
        %636 = vmatmul.mubr.f32.gmra.mrb[0].mxu0 %v504
        %v637 = vpop.f32.mrb[0].mxu0
        %v638 = vadd.f32 0.0, %v637
        %v639 = vpop.f32.mrb[0].mxu0
        %640 = vmatprep.mubr.f32.mxu0 0.0
        %641 = vmatmul.mubr.f32.gmra.mrb[0].mxu0 %v507
        %v642 = vpop.f32.mrb[0].mxu0
        %v643 = vadd.f32 0.0, %v642
        %v644 = vpop.f32.mrb[0].mxu0
        %645 = vmatprep.mubr.f32.mxu0 0.0
        %646 = vmatmul.mubr.f32.gmra.mrb[0].mxu0 %v510
        %v647 = vpop.f32.mrb[0].mxu0
        %v648 = vadd.f32 0.0, %v647
        %v649 = vpop.f32.mrb[0].mxu0
        %650 = vmatprep.mubr.f32.mxu0 0.0
        %651 = vmatmul.mubr.f32.gmra.mrb[0].mxu0 %v513
        %v652 = vpop.f32.mrb[0].mxu0
        %v653 = vadd.f32 0.0, %v652
        %v654 = vpop.f32.mrb[0].mxu0
        %655 = vmatprep.mubr.f32.mxu0 0.0
        %656 = vmatmul.mubr.f32.gmra.mrb[0].mxu0 %v516
        %v657 = vpop.f32.mrb[0].mxu0
        %v658 = vadd.f32 0.0, %v657
        %v659 = vpop.f32.mrb[0].mxu0
        %660 = vmatprep.mubr.f32.mxu0 0.0
        %661 = vmatmul.mubr.f32.gmra.mrb[0].mxu0 %v519
        %v662 = vpop.f32.mrb[0].mxu0
        %v663 = vadd.f32 0.0, %v662
        %v664 = vpop.f32.mrb[0].mxu0
        %665 = vmatprep.mubr.f32.mxu0 0.0
        %666 = vmatmul.mubr.f32.gmra.mrb[0].mxu0 %v522
        %v667 = vpop.f32.mrb[0].mxu0
        %v668 = vadd.f32 0.0, %v667
        %v669 = vpop.f32.mrb[0].mxu0
        %670 = vmatprep.mubr.f32.mxu0 0.0
        %671 = vmatmul.mubr.f32.gmra.mrb[0].mxu0 %v525
        %v672 = vpop.f32.mrb[0].mxu0
        %v673 = vadd.f32 0.0, %v672
        %v674 = vpop.f32.mrb[0].mxu0
        %675 = vdwg.mxu0
        %s676 = scalar_lea.vmem %s442, 4
        %v677 = vld [vmem:[%s676] sm:$0x7]
        %678 = vxpose.xlu0.b32.start [1/16] %v677, 128
        %679 = vxpose.xlu0.b32.cont [2/16] 0.0, 128
        %680 = vxpose.xlu0.b32.cont [3/16] 0.0, 128
        %681 = vxpose.xlu0.b32.cont [4/16] 0.0, 128
        %682 = vxpose.xlu0.b32.cont [5/16] 0.0, 128
        %683 = vxpose.xlu0.b32.cont [6/16] 0.0, 128
        %684 = vxpose.xlu0.b32.cont [7/16] 0.0, 128
        %685 = vxpose.xlu0.b32.cont [8/16] 0.0, 128
        %686 = vxpose.xlu0.b32.cont [9/16] 0.0, 128
        %687 = vxpose.xlu0.b32.cont [10/16] 0.0, 128
        %688 = vxpose.xlu0.b32.cont [11/16] 0.0, 128
        %689 = vxpose.xlu0.b32.cont [12/16] 0.0, 128
        %690 = vxpose.xlu0.b32.cont [13/16] 0.0, 128
        %691 = vxpose.xlu0.b32.cont [14/16] 0.0, 128
        %692 = vxpose.xlu0.b32.cont [15/16] 0.0, 128
        %693 = vxpose.xlu0.b32.end [16/16] 0.0, 128
        %v694 = vpop.trf.xlu0
        %v695 = vpop.trf.xlu0
        %v696 = vpop.trf.xlu0
        %v697 = vpop.trf.xlu0
        %v698 = vpop.trf.xlu0
        %v699 = vpop.trf.xlu0
        %v700 = vpop.trf.xlu0
        %v701 = vpop.trf.xlu0
        %v702 = vpop.trf.xlu0
        %v703 = vpop.trf.xlu0
        %v704 = vpop.trf.xlu0
        %v705 = vpop.trf.xlu0
        %v706 = vpop.trf.xlu0
        %v707 = vpop.trf.xlu0
        %v708 = vpop.trf.xlu0
        %v709 = vpop.trf.xlu0
        %v711 = vsel %vm478, %v694, 0
        %v714 = vsel %vm478, %v695, 0
        %v717 = vsel %vm478, %v696, 0
        %v720 = vsel %vm478, %v697, 0
        %v723 = vsel %vm478, %v698, 0
        %v726 = vsel %vm478, %v699, 0
        %v729 = vsel %vm478, %v700, 0
        %v732 = vsel %vm478, %v701, 0
        %v735 = vsel %vm478, %v702, 0
        %v738 = vsel %vm478, %v703, 0
        %v741 = vsel %vm478, %v704, 0
        %v744 = vsel %vm478, %v705, 0
        %v747 = vsel %vm478, %v706, 0
        %v750 = vsel %vm478, %v707, 0
        %v753 = vsel %vm478, %v708, 0
        %v756 = vsel %vm478, %v709, 0
        %758 = vmatprep.subr.mxu0 0.0
        %759 = vmatpush1.msra.mxu0 %v529
        %760 = vmatprep.subr.mxu0 0.0
        %761 = vmatpush1.msra.mxu0 0.0
        %762 = vmatprep.subr.mxu0 0.0
        %763 = vmatpush1.msra.mxu0 0.0
        %764 = vmatprep.subr.mxu0 0.0
        %765 = vmatpush1.msra.mxu0 0.0
        %766 = vmatprep.subr.mxu0 0.0
        %767 = vmatpush1.msra.mxu0 0.0
        %768 = vmatprep.subr.mxu0 0.0
        %769 = vmatpush1.msra.mxu0 0.0
        %770 = vmatprep.subr.mxu0 0.0
        %771 = vmatpush1.msra.mxu0 0.0
        %772 = vmatprep.subr.mxu0 0.0
        %773 = vmatpush1.msra.mxu0 0.0
        %774 = vmatprep.subr.mxu0 0.0
        %775 = vmatpush1.msra.mxu0 0.0
        %776 = vmatprep.subr.mxu0 0.0
        %777 = vmatpush1.msra.mxu0 0.0
        %778 = vmatprep.subr.mxu0 0.0
        %779 = vmatpush1.msra.mxu0 0.0
        %780 = vmatprep.subr.mxu0 0.0
        %781 = vmatpush1.msra.mxu0 0.0
        %782 = vmatprep.subr.mxu0 0.0
        %783 = vmatpush1.msra.mxu0 0.0
        %784 = vmatprep.subr.mxu0 0.0
        %785 = vmatpush1.msra.mxu0 0.0
        %786 = vmatprep.subr.mxu0 0.0
        %787 = vmatpush1.msra.mxu0 0.0
        %788 = vmatprep.subr.mxu0 0.0
        %789 = vmatpush1.msra.mxu0 0.0
        %790 = vmatprep.subr.mxu0 0.0
        %791 = vmatpush1.msra.mxu0 0.0
        %792 = vmatprep.subr.mxu0 0.0
        %793 = vmatpush1.msra.mxu0 0.0
        %794 = vmatprep.subr.mxu0 0.0
        %795 = vmatpush1.msra.mxu0 0.0
        %796 = vmatprep.subr.mxu0 0.0
        %797 = vmatpush1.msra.mxu0 0.0
        %798 = vmatprep.subr.mxu0 0.0
        %799 = vmatpush1.msra.mxu0 0.0
        %800 = vmatprep.subr.mxu0 0.0
        %801 = vmatpush1.msra.mxu0 0.0
        %802 = vmatprep.subr.mxu0 0.0
        %803 = vmatpush1.msra.mxu0 0.0
        %804 = vmatprep.subr.mxu0 0.0
        %805 = vmatpush1.msra.mxu0 0.0
        %806 = vmatprep.subr.mxu0 0.0
        %807 = vmatpush1.msra.mxu0 0.0
        %808 = vmatprep.subr.mxu0 0.0
        %809 = vmatpush1.msra.mxu0 0.0
        %810 = vmatprep.subr.mxu0 0.0
        %811 = vmatpush1.msra.mxu0 0.0
        %812 = vmatprep.subr.mxu0 0.0
        %813 = vmatpush1.msra.mxu0 0.0
        %814 = vmatprep.subr.mxu0 0.0
        %815 = vmatpush1.msra.mxu0 0.0
        %816 = vmatprep.subr.mxu0 0.0
        %817 = vmatpush1.msra.mxu0 0.0
        %818 = vmatprep.subr.mxu0 0.0
        %819 = vmatpush1.msra.mxu0 0.0
        %820 = vmatprep.subr.mxu0 0.0
        %821 = vmatpush1.msra.mxu0 0.0
        %822 = vmatprep.mubr.f32.mxu0 0.0
        %823 = vmatmul.mubr.f32.gmra.mrb[0].mxu0 %v711
        %v824 = vpop.f32.mrb[0].mxu0
        %v825 = vadd.f32 0.0, %v824
        %v826 = vpop.f32.mrb[0].mxu0
        %827 = vmatprep.mubr.f32.mxu0 0.0
        %828 = vmatmul.mubr.f32.gmra.mrb[0].mxu0 %v714
        %v829 = vpop.f32.mrb[0].mxu0
        %v830 = vadd.f32 0.0, %v829
        %v831 = vpop.f32.mrb[0].mxu0
        %832 = vmatprep.mubr.f32.mxu0 0.0
        %833 = vmatmul.mubr.f32.gmra.mrb[0].mxu0 %v717
        %v834 = vpop.f32.mrb[0].mxu0
        %v835 = vadd.f32 0.0, %v834
        %v836 = vpop.f32.mrb[0].mxu0
        %837 = vmatprep.mubr.f32.mxu0 0.0
        %838 = vmatmul.mubr.f32.gmra.mrb[0].mxu0 %v720
        %v839 = vpop.f32.mrb[0].mxu0
        %v840 = vadd.f32 0.0, %v839
        %v841 = vpop.f32.mrb[0].mxu0
        %842 = vmatprep.mubr.f32.mxu0 0.0
        %843 = vmatmul.mubr.f32.gmra.mrb[0].mxu0 %v723
        %v844 = vpop.f32.mrb[0].mxu0
        %v845 = vadd.f32 0.0, %v844
        %v846 = vpop.f32.mrb[0].mxu0
        %847 = vmatprep.mubr.f32.mxu0 0.0
        %848 = vmatmul.mubr.f32.gmra.mrb[0].mxu0 %v726
        %v849 = vpop.f32.mrb[0].mxu0
        %v850 = vadd.f32 0.0, %v849
        %v851 = vpop.f32.mrb[0].mxu0
        %852 = vmatprep.mubr.f32.mxu0 0.0
        %853 = vmatmul.mubr.f32.gmra.mrb[0].mxu0 %v729
        %v854 = vpop.f32.mrb[0].mxu0
        %v855 = vadd.f32 0.0, %v854
        %v856 = vpop.f32.mrb[0].mxu0
        %857 = vmatprep.mubr.f32.mxu0 0.0
        %858 = vmatmul.mubr.f32.gmra.mrb[0].mxu0 %v732
        %v859 = vpop.f32.mrb[0].mxu0
        %v860 = vadd.f32 0.0, %v859
        %v861 = vpop.f32.mrb[0].mxu0
        %862 = vmatprep.mubr.f32.mxu0 0.0
        %863 = vmatmul.mubr.f32.gmra.mrb[0].mxu0 %v735
        %v864 = vpop.f32.mrb[0].mxu0
        %v865 = vadd.f32 0.0, %v864
        %v866 = vpop.f32.mrb[0].mxu0
        %867 = vmatprep.mubr.f32.mxu0 0.0
        %868 = vmatmul.mubr.f32.gmra.mrb[0].mxu0 %v738
        %v869 = vpop.f32.mrb[0].mxu0
        %v870 = vadd.f32 0.0, %v869
        %v871 = vpop.f32.mrb[0].mxu0
        %872 = vmatprep.mubr.f32.mxu0 0.0
        %873 = vmatmul.mubr.f32.gmra.mrb[0].mxu0 %v741
        %v874 = vpop.f32.mrb[0].mxu0
        %v875 = vadd.f32 0.0, %v874
        %v876 = vpop.f32.mrb[0].mxu0
        %877 = vmatprep.mubr.f32.mxu0 0.0
        %878 = vmatmul.mubr.f32.gmra.mrb[0].mxu0 %v744
        %v879 = vpop.f32.mrb[0].mxu0
        %v880 = vadd.f32 0.0, %v879
        %v881 = vpop.f32.mrb[0].mxu0
        %882 = vmatprep.mubr.f32.mxu0 0.0
        %883 = vmatmul.mubr.f32.gmra.mrb[0].mxu0 %v747
        %v884 = vpop.f32.mrb[0].mxu0
        %v885 = vadd.f32 0.0, %v884
        %v886 = vpop.f32.mrb[0].mxu0
        %887 = vmatprep.mubr.f32.mxu0 0.0
        %888 = vmatmul.mubr.f32.gmra.mrb[0].mxu0 %v750
        %v889 = vpop.f32.mrb[0].mxu0
        %v890 = vadd.f32 0.0, %v889
        %v891 = vpop.f32.mrb[0].mxu0
        %892 = vmatprep.mubr.f32.mxu0 0.0
        %893 = vmatmul.mubr.f32.gmra.mrb[0].mxu0 %v753
        %v894 = vpop.f32.mrb[0].mxu0
        %v895 = vadd.f32 0.0, %v894
        %v896 = vpop.f32.mrb[0].mxu0
        %897 = vmatprep.mubr.f32.mxu0 0.0
        %898 = vmatmul.mubr.f32.gmra.mrb[0].mxu0 %v756
        %v899 = vpop.f32.mrb[0].mxu0
        %v900 = vadd.f32 0.0, %v899
        %v901 = vpop.f32.mrb[0].mxu0
        %902 = vdwg.mxu0
        %v903 = vld [vmem:[%s2] sm:$0x1]
        %v905 = vlaneseq
        %v906 = vshrl.u32 %v905, 7
        %v907 = vsub.s32 0, %v906
        %v908 = vrot.slane %v903, %v907
        %v910 = vadd.f32 %v598, %v908
        %v911 = vadd.f32 %v603, %v908
        %v912 = vadd.f32 %v608, %v908
        %v913 = vadd.f32 %v613, %v908
        %v914 = vadd.f32 %v618, %v908
        %v915 = vadd.f32 %v623, %v908
        %v916 = vadd.f32 %v628, %v908
        %v917 = vadd.f32 %v633, %v908
        %v918 = vadd.f32 %v638, %v908
        %v919 = vadd.f32 %v643, %v908
        %v920 = vadd.f32 %v648, %v908
        %v921 = vadd.f32 %v653, %v908
        %v922 = vadd.f32 %v658, %v908
        %v923 = vadd.f32 %v663, %v908
        %v924 = vadd.f32 %v668, %v908
        %v925 = vadd.f32 %v673, %v908
        %v926 = vadd.f32 %v825, %v908
        %v927 = vadd.f32 %v830, %v908
        %v928 = vadd.f32 %v835, %v908
        %v929 = vadd.f32 %v840, %v908
        %v930 = vadd.f32 %v845, %v908
        %v931 = vadd.f32 %v850, %v908
        %v932 = vadd.f32 %v855, %v908
        %v933 = vadd.f32 %v860, %v908
        %v934 = vadd.f32 %v865, %v908
        %v935 = vadd.f32 %v870, %v908
        %v936 = vadd.f32 %v875, %v908
        %v937 = vadd.f32 %v880, %v908
        %v938 = vadd.f32 %v885, %v908
        %v939 = vadd.f32 %v890, %v908
        %v940 = vadd.f32 %v895, %v908
        %v941 = vadd.f32 %v900, %v908
        %v942 = vmax.f32 %v910, 0.0
        %v943 = vmax.f32 %v911, 0.0
        %v944 = vmax.f32 %v912, 0.0
        %v945 = vmax.f32 %v913, 0.0
        %v946 = vmax.f32 %v914, 0.0
        %v947 = vmax.f32 %v915, 0.0
        %v948 = vmax.f32 %v916, 0.0
        %v949 = vmax.f32 %v917, 0.0
        %v950 = vmax.f32 %v918, 0.0
        %v951 = vmax.f32 %v919, 0.0
        %v952 = vmax.f32 %v920, 0.0
        %v953 = vmax.f32 %v921, 0.0
        %v954 = vmax.f32 %v922, 0.0
        %v955 = vmax.f32 %v923, 0.0
        %v956 = vmax.f32 %v924, 0.0
        %v957 = vmax.f32 %v925, 0.0
        %v958 = vmax.f32 %v926, 0.0
        %v959 = vmax.f32 %v927, 0.0
        %v960 = vmax.f32 %v928, 0.0
        %v961 = vmax.f32 %v929, 0.0
        %v962 = vmax.f32 %v930, 0.0
        %v963 = vmax.f32 %v931, 0.0
        %v964 = vmax.f32 %v932, 0.0
        %v965 = vmax.f32 %v933, 0.0
        %v966 = vmax.f32 %v934, 0.0
        %v967 = vmax.f32 %v935, 0.0
        %v968 = vmax.f32 %v936, 0.0
        %v969 = vmax.f32 %v937, 0.0
        %v970 = vmax.f32 %v938, 0.0
        %v971 = vmax.f32 %v939, 0.0
        %v972 = vmax.f32 %v940, 0.0
        %v973 = vmax.f32 %v941, 0.0
        %v974 = vld [vmem:[%s3] sm:$0xff]
        %v975 = vld [vmem:[%s3 + $0x8] sm:$0xff]
        %v976 = vld [vmem:[%s3 + $0x10] sm:$0xff]
        %v977 = vld [vmem:[%s3 + $0x18] sm:$0xff]
        %v978 = vld [vmem:[%s3 + $0x20] sm:$0xff]
        %v979 = vld [vmem:[%s3 + $0x28] sm:$0xff]
        %v980 = vld [vmem:[%s3 + $0x30] sm:$0xff]
        %v981 = vld [vmem:[%s3 + $0x38] sm:$0xff]
        %v982 = vld [vmem:[%s4] sm:$0x1]
        %v984 = vlaneseq
        %v985 = vshrl.u32 %v984, 7
        %v986 = vsub.s32 0, %v985
        %v987 = vrot.slane %v982, %v986
        %vm989 = vcmask 523264
        %v991 = vsel %vm989, %v942, 0
        %v994 = vsel %vm989, %v943, 0
        %v997 = vsel %vm989, %v944, 0
        %v1000 = vsel %vm989, %v945, 0
        %v1003 = vsel %vm989, %v946, 0
        %v1006 = vsel %vm989, %v947, 0
        %v1009 = vsel %vm989, %v948, 0
        %v1012 = vsel %vm989, %v949, 0
        %v1015 = vsel %vm989, %v950, 0
        %v1018 = vsel %vm989, %v951, 0
        %v1021 = vsel %vm989, %v952, 0
        %v1024 = vsel %vm989, %v953, 0
        %v1027 = vsel %vm989, %v954, 0
        %v1030 = vsel %vm989, %v955, 0
        %v1033 = vsel %vm989, %v956, 0
        %v1036 = vsel %vm989, %v957, 0
        %v1039 = vsel %vm989, %v958, 0
        %v1042 = vsel %vm989, %v959, 0
        %v1045 = vsel %vm989, %v960, 0
        %v1048 = vsel %vm989, %v961, 0
        %v1051 = vsel %vm989, %v962, 0
        %v1054 = vsel %vm989, %v963, 0
        %v1057 = vsel %vm989, %v964, 0
        %v1060 = vsel %vm989, %v965, 0
        %v1063 = vsel %vm989, %v966, 0
        %v1066 = vsel %vm989, %v967, 0
        %v1069 = vsel %vm989, %v968, 0
        %v1072 = vsel %vm989, %v969, 0
        %v1075 = vsel %vm989, %v970, 0
        %v1078 = vsel %vm989, %v971, 0
        %v1081 = vsel %vm989, %v972, 0
        %v1084 = vsel %vm989, %v973, 0
        %1086 = vmatprep.subr.mxu0 0.0
        %1087 = vmatpush1.msra.mxu0 %v974
        %1088 = vmatprep.subr.mxu0 0.0
        %1089 = vmatpush1.msra.mxu0 %v975
        %1090 = vmatprep.subr.mxu0 0.0
        %1091 = vmatpush1.msra.mxu0 %v976
        %1092 = vmatprep.subr.mxu0 0.0
        %1093 = vmatpush1.msra.mxu0 %v977
        %1094 = vmatprep.subr.mxu0 0.0
        %1095 = vmatpush1.msra.mxu0 %v978
        %1096 = vmatprep.subr.mxu0 0.0
        %1097 = vmatpush1.msra.mxu0 %v979
        %1098 = vmatprep.subr.mxu0 0.0
        %1099 = vmatpush1.msra.mxu0 %v980
        %1100 = vmatprep.subr.mxu0 0.0
        %1101 = vmatpush1.msra.mxu0 %v981
        %1102 = vmatprep.subr.mxu0 0.0
        %1103 = vmatpush1.msra.mxu0 0.0
        %1104 = vmatprep.subr.mxu0 0.0
        %1105 = vmatpush1.msra.mxu0 0.0
        %1106 = vmatprep.subr.mxu0 0.0
        %1107 = vmatpush1.msra.mxu0 0.0
        %1108 = vmatprep.subr.mxu0 0.0
        %1109 = vmatpush1.msra.mxu0 0.0
        %1110 = vmatprep.subr.mxu0 0.0
        %1111 = vmatpush1.msra.mxu0 0.0
        %1112 = vmatprep.subr.mxu0 0.0
        %1113 = vmatpush1.msra.mxu0 0.0
        %1114 = vmatprep.subr.mxu0 0.0
        %1115 = vmatpush1.msra.mxu0 0.0
        %1116 = vmatprep.subr.mxu0 0.0
        %1117 = vmatpush1.msra.mxu0 0.0
        %1118 = vmatprep.subr.mxu0 0.0
        %1119 = vmatpush1.msra.mxu0 0.0
        %1120 = vmatprep.subr.mxu0 0.0
        %1121 = vmatpush1.msra.mxu0 0.0
        %1122 = vmatprep.subr.mxu0 0.0
        %1123 = vmatpush1.msra.mxu0 0.0
        %1124 = vmatprep.subr.mxu0 0.0
        %1125 = vmatpush1.msra.mxu0 0.0
        %1126 = vmatprep.subr.mxu0 0.0
        %1127 = vmatpush1.msra.mxu0 0.0
        %1128 = vmatprep.subr.mxu0 0.0
        %1129 = vmatpush1.msra.mxu0 0.0
        %1130 = vmatprep.subr.mxu0 0.0
        %1131 = vmatpush1.msra.mxu0 0.0
        %1132 = vmatprep.subr.mxu0 0.0
        %1133 = vmatpush1.msra.mxu0 0.0
        %1134 = vmatprep.subr.mxu0 0.0
        %1135 = vmatpush1.msra.mxu0 0.0
        %1136 = vmatprep.subr.mxu0 0.0
        %1137 = vmatpush1.msra.mxu0 0.0
        %1138 = vmatprep.subr.mxu0 0.0
        %1139 = vmatpush1.msra.mxu0 0.0
        %1140 = vmatprep.subr.mxu0 0.0
        %1141 = vmatpush1.msra.mxu0 0.0
        %1142 = vmatprep.subr.mxu0 0.0
        %1143 = vmatpush1.msra.mxu0 0.0
        %1144 = vmatprep.subr.mxu0 0.0
        %1145 = vmatpush1.msra.mxu0 0.0
        %1146 = vmatprep.subr.mxu0 0.0
        %1147 = vmatpush1.msra.mxu0 0.0
        %1148 = vmatprep.subr.mxu0 0.0
        %1149 = vmatpush1.msra.mxu0 0.0
        %1150 = vmatprep.mubr.f32.mxu0 0.0
        %1151 = vmatmul.mubr.f32.gmra.mrb[0].mxu0 %v991
        %v1152 = vpop.f32.mrb[0].mxu0
        %v1153 = vadd.f32 %v987, %v1152
        %v1154 = vpop.f32.mrb[0].mxu0
        %1155 = vmatprep.mubr.f32.mxu0 0.0
        %1156 = vmatmul.mubr.f32.gmra.mrb[0].mxu0 %v994
        %v1157 = vpop.f32.mrb[0].mxu0
        %v1158 = vadd.f32 %v987, %v1157
        %v1159 = vpop.f32.mrb[0].mxu0
        %1160 = vmatprep.mubr.f32.mxu0 0.0
        %1161 = vmatmul.mubr.f32.gmra.mrb[0].mxu0 %v997
        %v1162 = vpop.f32.mrb[0].mxu0
        %v1163 = vadd.f32 %v987, %v1162
        %v1164 = vpop.f32.mrb[0].mxu0
        %1165 = vmatprep.mubr.f32.mxu0 0.0
        %1166 = vmatmul.mubr.f32.gmra.mrb[0].mxu0 %v1000
        %v1167 = vpop.f32.mrb[0].mxu0
        %v1168 = vadd.f32 %v987, %v1167
        %v1169 = vpop.f32.mrb[0].mxu0
        %1170 = vmatprep.mubr.f32.mxu0 0.0
        %1171 = vmatmul.mubr.f32.gmra.mrb[0].mxu0 %v1003
        %v1172 = vpop.f32.mrb[0].mxu0
        %v1173 = vadd.f32 %v987, %v1172
        %v1174 = vpop.f32.mrb[0].mxu0
        %1175 = vmatprep.mubr.f32.mxu0 0.0
        %1176 = vmatmul.mubr.f32.gmra.mrb[0].mxu0 %v1006
        %v1177 = vpop.f32.mrb[0].mxu0
        %v1178 = vadd.f32 %v987, %v1177
        %v1179 = vpop.f32.mrb[0].mxu0
        %1180 = vmatprep.mubr.f32.mxu0 0.0
        %1181 = vmatmul.mubr.f32.gmra.mrb[0].mxu0 %v1009
        %v1182 = vpop.f32.mrb[0].mxu0
        %v1183 = vadd.f32 %v987, %v1182
        %v1184 = vpop.f32.mrb[0].mxu0
        %1185 = vmatprep.mubr.f32.mxu0 0.0
        %1186 = vmatmul.mubr.f32.gmra.mrb[0].mxu0 %v1012
        %v1187 = vpop.f32.mrb[0].mxu0
        %v1188 = vadd.f32 %v987, %v1187
        %v1189 = vpop.f32.mrb[0].mxu0
        %1190 = vmatprep.mubr.f32.mxu0 0.0
        %1191 = vmatmul.mubr.f32.gmra.mrb[0].mxu0 %v1015
        %v1192 = vpop.f32.mrb[0].mxu0
        %v1193 = vadd.f32 %v987, %v1192
        %v1194 = vpop.f32.mrb[0].mxu0
        %1195 = vmatprep.mubr.f32.mxu0 0.0
        %1196 = vmatmul.mubr.f32.gmra.mrb[0].mxu0 %v1018
        %v1197 = vpop.f32.mrb[0].mxu0
        %v1198 = vadd.f32 %v987, %v1197
        %v1199 = vpop.f32.mrb[0].mxu0
        %1200 = vmatprep.mubr.f32.mxu0 0.0
        %1201 = vmatmul.mubr.f32.gmra.mrb[0].mxu0 %v1021
        %v1202 = vpop.f32.mrb[0].mxu0
        %v1203 = vadd.f32 %v987, %v1202
        %v1204 = vpop.f32.mrb[0].mxu0
        %1205 = vmatprep.mubr.f32.mxu0 0.0
        %1206 = vmatmul.mubr.f32.gmra.mrb[0].mxu0 %v1024
        %v1207 = vpop.f32.mrb[0].mxu0
        %v1208 = vadd.f32 %v987, %v1207
        %v1209 = vpop.f32.mrb[0].mxu0
        %1210 = vmatprep.mubr.f32.mxu0 0.0
        %1211 = vmatmul.mubr.f32.gmra.mrb[0].mxu0 %v1027
        %v1212 = vpop.f32.mrb[0].mxu0
        %v1213 = vadd.f32 %v987, %v1212
        %v1214 = vpop.f32.mrb[0].mxu0
        %1215 = vmatprep.mubr.f32.mxu0 0.0
        %1216 = vmatmul.mubr.f32.gmra.mrb[0].mxu0 %v1030
        %v1217 = vpop.f32.mrb[0].mxu0
        %v1218 = vadd.f32 %v987, %v1217
        %v1219 = vpop.f32.mrb[0].mxu0
        %1220 = vmatprep.mubr.f32.mxu0 0.0
        %1221 = vmatmul.mubr.f32.gmra.mrb[0].mxu0 %v1033
        %v1222 = vpop.f32.mrb[0].mxu0
        %v1223 = vadd.f32 %v987, %v1222
        %v1224 = vpop.f32.mrb[0].mxu0
        %1225 = vmatprep.mubr.f32.mxu0 0.0
        %1226 = vmatmul.mubr.f32.gmra.mrb[0].mxu0 %v1036
        %v1227 = vpop.f32.mrb[0].mxu0
        %v1228 = vadd.f32 %v987, %v1227
        %v1229 = vpop.f32.mrb[0].mxu0
        %1230 = vmatprep.mubr.f32.mxu0 0.0
        %1231 = vmatmul.mubr.f32.gmra.mrb[0].mxu0 %v1039
        %v1232 = vpop.f32.mrb[0].mxu0
        %v1233 = vadd.f32 %v987, %v1232
        %v1234 = vpop.f32.mrb[0].mxu0
        %1235 = vmatprep.mubr.f32.mxu0 0.0
        %1236 = vmatmul.mubr.f32.gmra.mrb[0].mxu0 %v1042
        %v1237 = vpop.f32.mrb[0].mxu0
        %v1238 = vadd.f32 %v987, %v1237
        %v1239 = vpop.f32.mrb[0].mxu0
        %1240 = vmatprep.mubr.f32.mxu0 0.0
        %1241 = vmatmul.mubr.f32.gmra.mrb[0].mxu0 %v1045
        %v1242 = vpop.f32.mrb[0].mxu0
        %v1243 = vadd.f32 %v987, %v1242
        %v1244 = vpop.f32.mrb[0].mxu0
        %1245 = vmatprep.mubr.f32.mxu0 0.0
        %1246 = vmatmul.mubr.f32.gmra.mrb[0].mxu0 %v1048
        %v1247 = vpop.f32.mrb[0].mxu0
        %v1248 = vadd.f32 %v987, %v1247
        %v1249 = vpop.f32.mrb[0].mxu0
        %1250 = vmatprep.mubr.f32.mxu0 0.0
        %1251 = vmatmul.mubr.f32.gmra.mrb[0].mxu0 %v1051
        %v1252 = vpop.f32.mrb[0].mxu0
        %v1253 = vadd.f32 %v987, %v1252
        %v1254 = vpop.f32.mrb[0].mxu0
        %1255 = vmatprep.mubr.f32.mxu0 0.0
        %1256 = vmatmul.mubr.f32.gmra.mrb[0].mxu0 %v1054
        %v1257 = vpop.f32.mrb[0].mxu0
        %v1258 = vadd.f32 %v987, %v1257
        %v1259 = vpop.f32.mrb[0].mxu0
        %1260 = vmatprep.mubr.f32.mxu0 0.0
        %1261 = vmatmul.mubr.f32.gmra.mrb[0].mxu0 %v1057
        %v1262 = vpop.f32.mrb[0].mxu0
        %v1263 = vadd.f32 %v987, %v1262
        %v1264 = vpop.f32.mrb[0].mxu0
        %1265 = vmatprep.mubr.f32.mxu0 0.0
        %1266 = vmatmul.mubr.f32.gmra.mrb[0].mxu0 %v1060
        %v1267 = vpop.f32.mrb[0].mxu0
        %v1268 = vadd.f32 %v987, %v1267
        %v1269 = vpop.f32.mrb[0].mxu0
        %1270 = vmatprep.mubr.f32.mxu0 0.0
        %1271 = vmatmul.mubr.f32.gmra.mrb[0].mxu0 %v1063
        %v1272 = vpop.f32.mrb[0].mxu0
        %v1273 = vadd.f32 %v987, %v1272
        %v1274 = vpop.f32.mrb[0].mxu0
        %1275 = vmatprep.mubr.f32.mxu0 0.0
        %1276 = vmatmul.mubr.f32.gmra.mrb[0].mxu0 %v1066
        %v1277 = vpop.f32.mrb[0].mxu0
        %v1278 = vadd.f32 %v987, %v1277
        %v1279 = vpop.f32.mrb[0].mxu0
        %1280 = vmatprep.mubr.f32.mxu0 0.0
        %1281 = vmatmul.mubr.f32.gmra.mrb[0].mxu0 %v1069
        %v1282 = vpop.f32.mrb[0].mxu0
        %v1283 = vadd.f32 %v987, %v1282
        %v1284 = vpop.f32.mrb[0].mxu0
        %1285 = vmatprep.mubr.f32.mxu0 0.0
        %1286 = vmatmul.mubr.f32.gmra.mrb[0].mxu0 %v1072
        %v1287 = vpop.f32.mrb[0].mxu0
        %v1288 = vadd.f32 %v987, %v1287
        %v1289 = vpop.f32.mrb[0].mxu0
        %1290 = vmatprep.mubr.f32.mxu0 0.0
        %1291 = vmatmul.mubr.f32.gmra.mrb[0].mxu0 %v1075
        %v1292 = vpop.f32.mrb[0].mxu0
        %v1293 = vadd.f32 %v987, %v1292
        %v1294 = vpop.f32.mrb[0].mxu0
        %1295 = vmatprep.mubr.f32.mxu0 0.0
        %1296 = vmatmul.mubr.f32.gmra.mrb[0].mxu0 %v1078
        %v1297 = vpop.f32.mrb[0].mxu0
        %v1298 = vadd.f32 %v987, %v1297
        %v1299 = vpop.f32.mrb[0].mxu0
        %1300 = vmatprep.mubr.f32.mxu0 0.0
        %1301 = vmatmul.mubr.f32.gmra.mrb[0].mxu0 %v1081
        %v1302 = vpop.f32.mrb[0].mxu0
        %v1303 = vadd.f32 %v987, %v1302
        %v1304 = vpop.f32.mrb[0].mxu0
        %1305 = vmatprep.mubr.f32.mxu0 0.0
        %1306 = vmatmul.mubr.f32.gmra.mrb[0].mxu0 %v1084
        %v1307 = vpop.f32.mrb[0].mxu0
        %v1308 = vadd.f32 %v987, %v1307
        %v1309 = vpop.f32.mrb[0].mxu0
        %1310 = vdwg.mxu0
        %v1311 = vmax.f32 %v1153, 0.0
        %v1312 = vmax.f32 %v1158, 0.0
        %v1313 = vmax.f32 %v1163, 0.0
        %v1314 = vmax.f32 %v1168, 0.0
        %v1315 = vmax.f32 %v1173, 0.0
        %v1316 = vmax.f32 %v1178, 0.0
        %v1317 = vmax.f32 %v1183, 0.0
        %v1318 = vmax.f32 %v1188, 0.0
        %v1319 = vmax.f32 %v1193, 0.0
        %v1320 = vmax.f32 %v1198, 0.0
        %v1321 = vmax.f32 %v1203, 0.0
        %v1322 = vmax.f32 %v1208, 0.0
        %v1323 = vmax.f32 %v1213, 0.0
        %v1324 = vmax.f32 %v1218, 0.0
        %v1325 = vmax.f32 %v1223, 0.0
        %v1326 = vmax.f32 %v1228, 0.0
        %v1327 = vmax.f32 %v1233, 0.0
        %v1328 = vmax.f32 %v1238, 0.0
        %v1329 = vmax.f32 %v1243, 0.0
        %v1330 = vmax.f32 %v1248, 0.0
        %v1331 = vmax.f32 %v1253, 0.0
        %v1332 = vmax.f32 %v1258, 0.0
        %v1333 = vmax.f32 %v1263, 0.0
        %v1334 = vmax.f32 %v1268, 0.0
        %v1335 = vmax.f32 %v1273, 0.0
        %v1336 = vmax.f32 %v1278, 0.0
        %v1337 = vmax.f32 %v1283, 0.0
        %v1338 = vmax.f32 %v1288, 0.0
        %v1339 = vmax.f32 %v1293, 0.0
        %v1340 = vmax.f32 %v1298, 0.0
        %v1341 = vmax.f32 %v1303, 0.0
        %v1342 = vmax.f32 %v1308, 0.0
        %v1343 = vld [vmem:[#allocation5] sm:$0xff]
        %v1344 = vld [vmem:[#allocation5 + $0x8] sm:$0xff]
        %v1345 = vld [vmem:[#allocation5 + $0x10] sm:$0xff]
        %v1346 = vld [vmem:[#allocation5 + $0x18] sm:$0xff]
        %v1347 = vld [vmem:[#allocation5 + $0x20] sm:$0xff]
        %v1348 = vld [vmem:[#allocation5 + $0x28] sm:$0xff]
        %v1349 = vld [vmem:[#allocation5 + $0x30] sm:$0xff]
        %v1350 = vld [vmem:[#allocation5 + $0x38] sm:$0xff]
        %v1351 = vld [vmem:[%s6] sm:$0x1]
        %v1353 = vlaneseq
        %v1354 = vshrl.u32 %v1353, 7
        %v1355 = vsub.s32 0, %v1354
        %v1356 = vrot.slane %v1351, %v1355
        %v1359 = vsel %vm989, %v1311, 0
        %v1362 = vsel %vm989, %v1312, 0
        %v1365 = vsel %vm989, %v1313, 0
        %v1368 = vsel %vm989, %v1314, 0
        %v1371 = vsel %vm989, %v1315, 0
        %v1374 = vsel %vm989, %v1316, 0
        %v1377 = vsel %vm989, %v1317, 0
        %v1380 = vsel %vm989, %v1318, 0
        %v1383 = vsel %vm989, %v1319, 0
        %v1386 = vsel %vm989, %v1320, 0
        %v1389 = vsel %vm989, %v1321, 0
        %v1392 = vsel %vm989, %v1322, 0
        %v1395 = vsel %vm989, %v1323, 0
        %v1398 = vsel %vm989, %v1324, 0
        %v1401 = vsel %vm989, %v1325, 0
        %v1404 = vsel %vm989, %v1326, 0
        %v1407 = vsel %vm989, %v1327, 0
        %v1410 = vsel %vm989, %v1328, 0
        %v1413 = vsel %vm989, %v1329, 0
        %v1416 = vsel %vm989, %v1330, 0
        %v1419 = vsel %vm989, %v1331, 0
        %v1422 = vsel %vm989, %v1332, 0
        %v1425 = vsel %vm989, %v1333, 0
        %v1428 = vsel %vm989, %v1334, 0
        %v1431 = vsel %vm989, %v1335, 0
        %v1434 = vsel %vm989, %v1336, 0
        %v1437 = vsel %vm989, %v1337, 0
        %v1440 = vsel %vm989, %v1338, 0
        %v1443 = vsel %vm989, %v1339, 0
        %v1446 = vsel %vm989, %v1340, 0
        %v1449 = vsel %vm989, %v1341, 0
        %v1452 = vsel %vm989, %v1342, 0
        %1454 = vmatprep.subr.mxu0 0.0
        %1455 = vmatpush1.msra.mxu0 %v1343
        %1456 = vmatprep.subr.mxu0 0.0
        %1457 = vmatpush1.msra.mxu0 %v1344
        %1458 = vmatprep.subr.mxu0 0.0
        %1459 = vmatpush1.msra.mxu0 %v1345
        %1460 = vmatprep.subr.mxu0 0.0
        %1461 = vmatpush1.msra.mxu0 %v1346
        %1462 = vmatprep.subr.mxu0 0.0
        %1463 = vmatpush1.msra.mxu0 %v1347
        %1464 = vmatprep.subr.mxu0 0.0
        %1465 = vmatpush1.msra.mxu0 %v1348
        %1466 = vmatprep.subr.mxu0 0.0
        %1467 = vmatpush1.msra.mxu0 %v1349
        %1468 = vmatprep.subr.mxu0 0.0
        %1469 = vmatpush1.msra.mxu0 %v1350
        %1470 = vmatprep.subr.mxu0 0.0
        %1471 = vmatpush1.msra.mxu0 0.0
        %1472 = vmatprep.subr.mxu0 0.0
        %1473 = vmatpush1.msra.mxu0 0.0
        %1474 = vmatprep.subr.mxu0 0.0
        %1475 = vmatpush1.msra.mxu0 0.0
        %1476 = vmatprep.subr.mxu0 0.0
        %1477 = vmatpush1.msra.mxu0 0.0
        %1478 = vmatprep.subr.mxu0 0.0
        %1479 = vmatpush1.msra.mxu0 0.0
        %1480 = vmatprep.subr.mxu0 0.0
        %1481 = vmatpush1.msra.mxu0 0.0
        %1482 = vmatprep.subr.mxu0 0.0
        %1483 = vmatpush1.msra.mxu0 0.0
        %1484 = vmatprep.subr.mxu0 0.0
        %1485 = vmatpush1.msra.mxu0 0.0
        %1486 = vmatprep.subr.mxu0 0.0
        %1487 = vmatpush1.msra.mxu0 0.0
        %1488 = vmatprep.subr.mxu0 0.0
        %1489 = vmatpush1.msra.mxu0 0.0
        %1490 = vmatprep.subr.mxu0 0.0
        %1491 = vmatpush1.msra.mxu0 0.0
        %1492 = vmatprep.subr.mxu0 0.0
        %1493 = vmatpush1.msra.mxu0 0.0
        %1494 = vmatprep.subr.mxu0 0.0
        %1495 = vmatpush1.msra.mxu0 0.0
        %1496 = vmatprep.subr.mxu0 0.0
        %1497 = vmatpush1.msra.mxu0 0.0
        %1498 = vmatprep.subr.mxu0 0.0
        %1499 = vmatpush1.msra.mxu0 0.0
        %1500 = vmatprep.subr.mxu0 0.0
        %1501 = vmatpush1.msra.mxu0 0.0
        %1502 = vmatprep.subr.mxu0 0.0
        %1503 = vmatpush1.msra.mxu0 0.0
        %1504 = vmatprep.subr.mxu0 0.0
        %1505 = vmatpush1.msra.mxu0 0.0
        %1506 = vmatprep.subr.mxu0 0.0
        %1507 = vmatpush1.msra.mxu0 0.0
        %1508 = vmatprep.subr.mxu0 0.0
        %1509 = vmatpush1.msra.mxu0 0.0
        %1510 = vmatprep.subr.mxu0 0.0
        %1511 = vmatpush1.msra.mxu0 0.0
        %1512 = vmatprep.subr.mxu0 0.0
        %1513 = vmatpush1.msra.mxu0 0.0
        %1514 = vmatprep.subr.mxu0 0.0
        %1515 = vmatpush1.msra.mxu0 0.0
        %1516 = vmatprep.subr.mxu0 0.0
        %1517 = vmatpush1.msra.mxu0 0.0
        %1518 = vmatprep.mubr.f32.mxu0 0.0
        %1519 = vmatmul.mubr.f32.gmra.mrb[0].mxu0 %v1359
        %v1520 = vpop.f32.mrb[0].mxu0
        %v1521 = vadd.f32 %v1356, %v1520
        %v1522 = vpop.f32.mrb[0].mxu0
        %1523 = vmatprep.mubr.f32.mxu0 0.0
        %1524 = vmatmul.mubr.f32.gmra.mrb[0].mxu0 %v1362
        %v1525 = vpop.f32.mrb[0].mxu0
        %v1526 = vadd.f32 %v1356, %v1525
        %v1527 = vpop.f32.mrb[0].mxu0
        %1528 = vmatprep.mubr.f32.mxu0 0.0
        %1529 = vmatmul.mubr.f32.gmra.mrb[0].mxu0 %v1365
        %v1530 = vpop.f32.mrb[0].mxu0
        %v1531 = vadd.f32 %v1356, %v1530
        %v1532 = vpop.f32.mrb[0].mxu0
        %1533 = vmatprep.mubr.f32.mxu0 0.0
        %1534 = vmatmul.mubr.f32.gmra.mrb[0].mxu0 %v1368
        %v1535 = vpop.f32.mrb[0].mxu0
        %v1536 = vadd.f32 %v1356, %v1535
        %v1537 = vpop.f32.mrb[0].mxu0
        %1538 = vmatprep.mubr.f32.mxu0 0.0
        %1539 = vmatmul.mubr.f32.gmra.mrb[0].mxu0 %v1371
        %v1540 = vpop.f32.mrb[0].mxu0
        %v1541 = vadd.f32 %v1356, %v1540
        %v1542 = vpop.f32.mrb[0].mxu0
        %1543 = vmatprep.mubr.f32.mxu0 0.0
        %1544 = vmatmul.mubr.f32.gmra.mrb[0].mxu0 %v1374
        %v1545 = vpop.f32.mrb[0].mxu0
        %v1546 = vadd.f32 %v1356, %v1545
        %v1547 = vpop.f32.mrb[0].mxu0
        %1548 = vmatprep.mubr.f32.mxu0 0.0
        %1549 = vmatmul.mubr.f32.gmra.mrb[0].mxu0 %v1377
        %v1550 = vpop.f32.mrb[0].mxu0
        %v1551 = vadd.f32 %v1356, %v1550
        %v1552 = vpop.f32.mrb[0].mxu0
        %1553 = vmatprep.mubr.f32.mxu0 0.0
        %1554 = vmatmul.mubr.f32.gmra.mrb[0].mxu0 %v1380
        %v1555 = vpop.f32.mrb[0].mxu0
        %v1556 = vadd.f32 %v1356, %v1555
        %v1557 = vpop.f32.mrb[0].mxu0
        %1558 = vmatprep.mubr.f32.mxu0 0.0
        %1559 = vmatmul.mubr.f32.gmra.mrb[0].mxu0 %v1383
        %v1560 = vpop.f32.mrb[0].mxu0
        %v1561 = vadd.f32 %v1356, %v1560
        %v1562 = vpop.f32.mrb[0].mxu0
        %1563 = vmatprep.mubr.f32.mxu0 0.0
        %1564 = vmatmul.mubr.f32.gmra.mrb[0].mxu0 %v1386
        %v1565 = vpop.f32.mrb[0].mxu0
        %v1566 = vadd.f32 %v1356, %v1565
        %v1567 = vpop.f32.mrb[0].mxu0
        %1568 = vmatprep.mubr.f32.mxu0 0.0
        %1569 = vmatmul.mubr.f32.gmra.mrb[0].mxu0 %v1389
        %v1570 = vpop.f32.mrb[0].mxu0
        %v1571 = vadd.f32 %v1356, %v1570
        %v1572 = vpop.f32.mrb[0].mxu0
        %1573 = vmatprep.mubr.f32.mxu0 0.0
        %1574 = vmatmul.mubr.f32.gmra.mrb[0].mxu0 %v1392
        %v1575 = vpop.f32.mrb[0].mxu0
        %v1576 = vadd.f32 %v1356, %v1575
        %v1577 = vpop.f32.mrb[0].mxu0
        %1578 = vmatprep.mubr.f32.mxu0 0.0
        %1579 = vmatmul.mubr.f32.gmra.mrb[0].mxu0 %v1395
        %v1580 = vpop.f32.mrb[0].mxu0
        %v1581 = vadd.f32 %v1356, %v1580
        %v1582 = vpop.f32.mrb[0].mxu0
        %1583 = vmatprep.mubr.f32.mxu0 0.0
        %1584 = vmatmul.mubr.f32.gmra.mrb[0].mxu0 %v1398
        %v1585 = vpop.f32.mrb[0].mxu0
        %v1586 = vadd.f32 %v1356, %v1585
        %v1587 = vpop.f32.mrb[0].mxu0
        %1588 = vmatprep.mubr.f32.mxu0 0.0
        %1589 = vmatmul.mubr.f32.gmra.mrb[0].mxu0 %v1401
        %v1590 = vpop.f32.mrb[0].mxu0
        %v1591 = vadd.f32 %v1356, %v1590
        %v1592 = vpop.f32.mrb[0].mxu0
        %1593 = vmatprep.mubr.f32.mxu0 0.0
        %1594 = vmatmul.mubr.f32.gmra.mrb[0].mxu0 %v1404
        %v1595 = vpop.f32.mrb[0].mxu0
        %v1596 = vadd.f32 %v1356, %v1595
        %v1597 = vpop.f32.mrb[0].mxu0
        %1598 = vmatprep.mubr.f32.mxu0 0.0
        %1599 = vmatmul.mubr.f32.gmra.mrb[0].mxu0 %v1407
        %v1600 = vpop.f32.mrb[0].mxu0
        %v1601 = vadd.f32 %v1356, %v1600
        %v1602 = vpop.f32.mrb[0].mxu0
        %1603 = vmatprep.mubr.f32.mxu0 0.0
        %1604 = vmatmul.mubr.f32.gmra.mrb[0].mxu0 %v1410
        %v1605 = vpop.f32.mrb[0].mxu0
        %v1606 = vadd.f32 %v1356, %v1605
        %v1607 = vpop.f32.mrb[0].mxu0
        %1608 = vmatprep.mubr.f32.mxu0 0.0
        %1609 = vmatmul.mubr.f32.gmra.mrb[0].mxu0 %v1413
        %v1610 = vpop.f32.mrb[0].mxu0
        %v1611 = vadd.f32 %v1356, %v1610
        %v1612 = vpop.f32.mrb[0].mxu0
        %1613 = vmatprep.mubr.f32.mxu0 0.0
        %1614 = vmatmul.mubr.f32.gmra.mrb[0].mxu0 %v1416
        %v1615 = vpop.f32.mrb[0].mxu0
        %v1616 = vadd.f32 %v1356, %v1615
        %v1617 = vpop.f32.mrb[0].mxu0
        %1618 = vmatprep.mubr.f32.mxu0 0.0
        %1619 = vmatmul.mubr.f32.gmra.mrb[0].mxu0 %v1419
        %v1620 = vpop.f32.mrb[0].mxu0
        %v1621 = vadd.f32 %v1356, %v1620
        %v1622 = vpop.f32.mrb[0].mxu0
        %1623 = vmatprep.mubr.f32.mxu0 0.0
        %1624 = vmatmul.mubr.f32.gmra.mrb[0].mxu0 %v1422
        %v1625 = vpop.f32.mrb[0].mxu0
        %v1626 = vadd.f32 %v1356, %v1625
        %v1627 = vpop.f32.mrb[0].mxu0
        %1628 = vmatprep.mubr.f32.mxu0 0.0
        %1629 = vmatmul.mubr.f32.gmra.mrb[0].mxu0 %v1425
        %v1630 = vpop.f32.mrb[0].mxu0
        %v1631 = vadd.f32 %v1356, %v1630
        %v1632 = vpop.f32.mrb[0].mxu0
        %1633 = vmatprep.mubr.f32.mxu0 0.0
        %1634 = vmatmul.mubr.f32.gmra.mrb[0].mxu0 %v1428
        %v1635 = vpop.f32.mrb[0].mxu0
        %v1636 = vadd.f32 %v1356, %v1635
        %v1637 = vpop.f32.mrb[0].mxu0
        %1638 = vmatprep.mubr.f32.mxu0 0.0
        %1639 = vmatmul.mubr.f32.gmra.mrb[0].mxu0 %v1431
        %v1640 = vpop.f32.mrb[0].mxu0
        %v1641 = vadd.f32 %v1356, %v1640
        %v1642 = vpop.f32.mrb[0].mxu0
        %1643 = vmatprep.mubr.f32.mxu0 0.0
        %1644 = vmatmul.mubr.f32.gmra.mrb[0].mxu0 %v1434
        %v1645 = vpop.f32.mrb[0].mxu0
        %v1646 = vadd.f32 %v1356, %v1645
        %v1647 = vpop.f32.mrb[0].mxu0
        %1648 = vmatprep.mubr.f32.mxu0 0.0
        %1649 = vmatmul.mubr.f32.gmra.mrb[0].mxu0 %v1437
        %v1650 = vpop.f32.mrb[0].mxu0
        %v1651 = vadd.f32 %v1356, %v1650
        %v1652 = vpop.f32.mrb[0].mxu0
        %1653 = vmatprep.mubr.f32.mxu0 0.0
        %1654 = vmatmul.mubr.f32.gmra.mrb[0].mxu0 %v1440
        %v1655 = vpop.f32.mrb[0].mxu0
        %v1656 = vadd.f32 %v1356, %v1655
        %v1657 = vpop.f32.mrb[0].mxu0
        %1658 = vmatprep.mubr.f32.mxu0 0.0
        %1659 = vmatmul.mubr.f32.gmra.mrb[0].mxu0 %v1443
        %v1660 = vpop.f32.mrb[0].mxu0
        %v1661 = vadd.f32 %v1356, %v1660
        %v1662 = vpop.f32.mrb[0].mxu0
        %1663 = vmatprep.mubr.f32.mxu0 0.0
        %1664 = vmatmul.mubr.f32.gmra.mrb[0].mxu0 %v1446
        %v1665 = vpop.f32.mrb[0].mxu0
        %v1666 = vadd.f32 %v1356, %v1665
        %v1667 = vpop.f32.mrb[0].mxu0
        %1668 = vmatprep.mubr.f32.mxu0 0.0
        %1669 = vmatmul.mubr.f32.gmra.mrb[0].mxu0 %v1449
        %v1670 = vpop.f32.mrb[0].mxu0
        %v1671 = vadd.f32 %v1356, %v1670
        %v1672 = vpop.f32.mrb[0].mxu0
        %1673 = vmatprep.mubr.f32.mxu0 0.0
        %1674 = vmatmul.mubr.f32.gmra.mrb[0].mxu0 %v1452
        %v1675 = vpop.f32.mrb[0].mxu0
        %v1676 = vadd.f32 %v1356, %v1675
        %v1677 = vpop.f32.mrb[0].mxu0
        %1678 = vdwg.mxu0
        %v1679 = vmax.f32 %v1521, 0.0
        %v1680 = vmax.f32 %v1526, 0.0
        %v1681 = vmax.f32 %v1531, 0.0
        %v1682 = vmax.f32 %v1536, 0.0
        %v1683 = vmax.f32 %v1541, 0.0
        %v1684 = vmax.f32 %v1546, 0.0
        %v1685 = vmax.f32 %v1551, 0.0
        %v1686 = vmax.f32 %v1556, 0.0
        %v1687 = vmax.f32 %v1561, 0.0
        %v1688 = vmax.f32 %v1566, 0.0
        %v1689 = vmax.f32 %v1571, 0.0
        %v1690 = vmax.f32 %v1576, 0.0
        %v1691 = vmax.f32 %v1581, 0.0
        %v1692 = vmax.f32 %v1586, 0.0
        %v1693 = vmax.f32 %v1591, 0.0
        %v1694 = vmax.f32 %v1596, 0.0
        %v1695 = vmax.f32 %v1601, 0.0
        %v1696 = vmax.f32 %v1606, 0.0
        %v1697 = vmax.f32 %v1611, 0.0
        %v1698 = vmax.f32 %v1616, 0.0
        %v1699 = vmax.f32 %v1621, 0.0
        %v1700 = vmax.f32 %v1626, 0.0
        %v1701 = vmax.f32 %v1631, 0.0
        %v1702 = vmax.f32 %v1636, 0.0
        %v1703 = vmax.f32 %v1641, 0.0
        %v1704 = vmax.f32 %v1646, 0.0
        %v1705 = vmax.f32 %v1651, 0.0
        %v1706 = vmax.f32 %v1656, 0.0
        %v1707 = vmax.f32 %v1661, 0.0
        %v1708 = vmax.f32 %v1666, 0.0
        %v1709 = vmax.f32 %v1671, 0.0
        %v1710 = vmax.f32 %v1676, 0.0
        %v1711 = vld [vmem:[#allocation7] sm:$0xff]
        %v1712 = vld [vmem:[#allocation7 + $0x8] sm:$0xff]
        %v1713 = vld [vmem:[#allocation7 + $0x10] sm:$0xff]
        %v1714 = vld [vmem:[#allocation7 + $0x18] sm:$0xff]
        %v1715 = vld [vmem:[#allocation7 + $0x20] sm:$0xff]
        %v1716 = vld [vmem:[#allocation7 + $0x28] sm:$0xff]
        %v1717 = vld [vmem:[#allocation7 + $0x30] sm:$0xff]
        %v1718 = vld [vmem:[#allocation7 + $0x38] sm:$0xff]
        %v1719 = vld [vmem:[%s8] sm:$0x1]
        %v1721 = vlaneseq
        %v1722 = vshrl.u32 %v1721, 7
        %v1723 = vsub.s32 0, %v1722
        %v1724 = vrot.slane %v1719, %v1723
        %v1727 = vsel %vm989, %v1679, 0
        %v1730 = vsel %vm989, %v1680, 0
        %v1733 = vsel %vm989, %v1681, 0
        %v1736 = vsel %vm989, %v1682, 0
        %v1739 = vsel %vm989, %v1683, 0
        %v1742 = vsel %vm989, %v1684, 0
        %v1745 = vsel %vm989, %v1685, 0
        %v1748 = vsel %vm989, %v1686, 0
        %v1751 = vsel %vm989, %v1687, 0
        %v1754 = vsel %vm989, %v1688, 0
        %v1757 = vsel %vm989, %v1689, 0
        %v1760 = vsel %vm989, %v1690, 0
        %v1763 = vsel %vm989, %v1691, 0
        %v1766 = vsel %vm989, %v1692, 0
        %v1769 = vsel %vm989, %v1693, 0
        %v1772 = vsel %vm989, %v1694, 0
        %v1775 = vsel %vm989, %v1695, 0
        %v1778 = vsel %vm989, %v1696, 0
        %v1781 = vsel %vm989, %v1697, 0
        %v1784 = vsel %vm989, %v1698, 0
        %v1787 = vsel %vm989, %v1699, 0
        %v1790 = vsel %vm989, %v1700, 0
        %v1793 = vsel %vm989, %v1701, 0
        %v1796 = vsel %vm989, %v1702, 0
        %v1799 = vsel %vm989, %v1703, 0
        %v1802 = vsel %vm989, %v1704, 0
        %v1805 = vsel %vm989, %v1705, 0
        %v1808 = vsel %vm989, %v1706, 0
        %v1811 = vsel %vm989, %v1707, 0
        %v1814 = vsel %vm989, %v1708, 0
        %v1817 = vsel %vm989, %v1709, 0
        %v1820 = vsel %vm989, %v1710, 0
        %1822 = vmatprep.subr.mxu0 0.0
        %1823 = vmatpush1.msra.mxu0 %v1711
        %1824 = vmatprep.subr.mxu0 0.0
        %1825 = vmatpush1.msra.mxu0 %v1712
        %1826 = vmatprep.subr.mxu0 0.0
        %1827 = vmatpush1.msra.mxu0 %v1713
        %1828 = vmatprep.subr.mxu0 0.0
        %1829 = vmatpush1.msra.mxu0 %v1714
        %1830 = vmatprep.subr.mxu0 0.0
        %1831 = vmatpush1.msra.mxu0 %v1715
        %1832 = vmatprep.subr.mxu0 0.0
        %1833 = vmatpush1.msra.mxu0 %v1716
        %1834 = vmatprep.subr.mxu0 0.0
        %1835 = vmatpush1.msra.mxu0 %v1717
        %1836 = vmatprep.subr.mxu0 0.0
        %1837 = vmatpush1.msra.mxu0 %v1718
        %1838 = vmatprep.subr.mxu0 0.0
        %1839 = vmatpush1.msra.mxu0 0.0
        %1840 = vmatprep.subr.mxu0 0.0
        %1841 = vmatpush1.msra.mxu0 0.0
        %1842 = vmatprep.subr.mxu0 0.0
        %1843 = vmatpush1.msra.mxu0 0.0
        %1844 = vmatprep.subr.mxu0 0.0
        %1845 = vmatpush1.msra.mxu0 0.0
        %1846 = vmatprep.subr.mxu0 0.0
        %1847 = vmatpush1.msra.mxu0 0.0
        %1848 = vmatprep.subr.mxu0 0.0
        %1849 = vmatpush1.msra.mxu0 0.0
        %1850 = vmatprep.subr.mxu0 0.0
        %1851 = vmatpush1.msra.mxu0 0.0
        %1852 = vmatprep.subr.mxu0 0.0
        %1853 = vmatpush1.msra.mxu0 0.0
        %1854 = vmatprep.subr.mxu0 0.0
        %1855 = vmatpush1.msra.mxu0 0.0
        %1856 = vmatprep.subr.mxu0 0.0
        %1857 = vmatpush1.msra.mxu0 0.0
        %1858 = vmatprep.subr.mxu0 0.0
        %1859 = vmatpush1.msra.mxu0 0.0
        %1860 = vmatprep.subr.mxu0 0.0
        %1861 = vmatpush1.msra.mxu0 0.0
        %1862 = vmatprep.subr.mxu0 0.0
        %1863 = vmatpush1.msra.mxu0 0.0
        %1864 = vmatprep.subr.mxu0 0.0
        %1865 = vmatpush1.msra.mxu0 0.0
        %1866 = vmatprep.subr.mxu0 0.0
        %1867 = vmatpush1.msra.mxu0 0.0
        %1868 = vmatprep.subr.mxu0 0.0
        %1869 = vmatpush1.msra.mxu0 0.0
        %1870 = vmatprep.subr.mxu0 0.0
        %1871 = vmatpush1.msra.mxu0 0.0
        %1872 = vmatprep.subr.mxu0 0.0
        %1873 = vmatpush1.msra.mxu0 0.0
        %1874 = vmatprep.subr.mxu0 0.0
        %1875 = vmatpush1.msra.mxu0 0.0
        %1876 = vmatprep.subr.mxu0 0.0
        %1877 = vmatpush1.msra.mxu0 0.0
        %1878 = vmatprep.subr.mxu0 0.0
        %1879 = vmatpush1.msra.mxu0 0.0
        %1880 = vmatprep.subr.mxu0 0.0
        %1881 = vmatpush1.msra.mxu0 0.0
        %1882 = vmatprep.subr.mxu0 0.0
        %1883 = vmatpush1.msra.mxu0 0.0
        %1884 = vmatprep.subr.mxu0 0.0
        %1885 = vmatpush1.msra.mxu0 0.0
        %1886 = vmatprep.mubr.f32.mxu0 0.0
        %1887 = vmatmul.mubr.f32.gmra.mrb[0].mxu0 %v1727
        %v1888 = vpop.f32.mrb[0].mxu0
        %v1889 = vadd.f32 %v1724, %v1888
        %v1890 = vpop.f32.mrb[0].mxu0
        %1891 = vmatprep.mubr.f32.mxu0 0.0
        %1892 = vmatmul.mubr.f32.gmra.mrb[0].mxu0 %v1730
        %v1893 = vpop.f32.mrb[0].mxu0
        %v1894 = vadd.f32 %v1724, %v1893
        %v1895 = vpop.f32.mrb[0].mxu0
        %1896 = vmatprep.mubr.f32.mxu0 0.0
        %1897 = vmatmul.mubr.f32.gmra.mrb[0].mxu0 %v1733
        %v1898 = vpop.f32.mrb[0].mxu0
        %v1899 = vadd.f32 %v1724, %v1898
        %v1900 = vpop.f32.mrb[0].mxu0
        %1901 = vmatprep.mubr.f32.mxu0 0.0
        %1902 = vmatmul.mubr.f32.gmra.mrb[0].mxu0 %v1736
        %v1903 = vpop.f32.mrb[0].mxu0
        %v1904 = vadd.f32 %v1724, %v1903
        %v1905 = vpop.f32.mrb[0].mxu0
        %1906 = vmatprep.mubr.f32.mxu0 0.0
        %1907 = vmatmul.mubr.f32.gmra.mrb[0].mxu0 %v1739
        %v1908 = vpop.f32.mrb[0].mxu0
        %v1909 = vadd.f32 %v1724, %v1908
        %v1910 = vpop.f32.mrb[0].mxu0
        %1911 = vmatprep.mubr.f32.mxu0 0.0
        %1912 = vmatmul.mubr.f32.gmra.mrb[0].mxu0 %v1742
        %v1913 = vpop.f32.mrb[0].mxu0
        %v1914 = vadd.f32 %v1724, %v1913
        %v1915 = vpop.f32.mrb[0].mxu0
        %1916 = vmatprep.mubr.f32.mxu0 0.0
        %1917 = vmatmul.mubr.f32.gmra.mrb[0].mxu0 %v1745
        %v1918 = vpop.f32.mrb[0].mxu0
        %v1919 = vadd.f32 %v1724, %v1918
        %v1920 = vpop.f32.mrb[0].mxu0
        %1921 = vmatprep.mubr.f32.mxu0 0.0
        %1922 = vmatmul.mubr.f32.gmra.mrb[0].mxu0 %v1748
        %v1923 = vpop.f32.mrb[0].mxu0
        %v1924 = vadd.f32 %v1724, %v1923
        %v1925 = vpop.f32.mrb[0].mxu0
        %1926 = vmatprep.mubr.f32.mxu0 0.0
        %1927 = vmatmul.mubr.f32.gmra.mrb[0].mxu0 %v1751
        %v1928 = vpop.f32.mrb[0].mxu0
        %v1929 = vadd.f32 %v1724, %v1928
        %v1930 = vpop.f32.mrb[0].mxu0
        %1931 = vmatprep.mubr.f32.mxu0 0.0
        %1932 = vmatmul.mubr.f32.gmra.mrb[0].mxu0 %v1754
        %v1933 = vpop.f32.mrb[0].mxu0
        %v1934 = vadd.f32 %v1724, %v1933
        %v1935 = vpop.f32.mrb[0].mxu0
        %1936 = vmatprep.mubr.f32.mxu0 0.0
        %1937 = vmatmul.mubr.f32.gmra.mrb[0].mxu0 %v1757
        %v1938 = vpop.f32.mrb[0].mxu0
        %v1939 = vadd.f32 %v1724, %v1938
        %v1940 = vpop.f32.mrb[0].mxu0
        %1941 = vmatprep.mubr.f32.mxu0 0.0
        %1942 = vmatmul.mubr.f32.gmra.mrb[0].mxu0 %v1760
        %v1943 = vpop.f32.mrb[0].mxu0
        %v1944 = vadd.f32 %v1724, %v1943
        %v1945 = vpop.f32.mrb[0].mxu0
        %1946 = vmatprep.mubr.f32.mxu0 0.0
        %1947 = vmatmul.mubr.f32.gmra.mrb[0].mxu0 %v1763
        %v1948 = vpop.f32.mrb[0].mxu0
        %v1949 = vadd.f32 %v1724, %v1948
        %v1950 = vpop.f32.mrb[0].mxu0
        %1951 = vmatprep.mubr.f32.mxu0 0.0
        %1952 = vmatmul.mubr.f32.gmra.mrb[0].mxu0 %v1766
        %v1953 = vpop.f32.mrb[0].mxu0
        %v1954 = vadd.f32 %v1724, %v1953
        %v1955 = vpop.f32.mrb[0].mxu0
        %1956 = vmatprep.mubr.f32.mxu0 0.0
        %1957 = vmatmul.mubr.f32.gmra.mrb[0].mxu0 %v1769
        %v1958 = vpop.f32.mrb[0].mxu0
        %v1959 = vadd.f32 %v1724, %v1958
        %v1960 = vpop.f32.mrb[0].mxu0
        %1961 = vmatprep.mubr.f32.mxu0 0.0
        %1962 = vmatmul.mubr.f32.gmra.mrb[0].mxu0 %v1772
        %v1963 = vpop.f32.mrb[0].mxu0
        %v1964 = vadd.f32 %v1724, %v1963
        %v1965 = vpop.f32.mrb[0].mxu0
        %1966 = vmatprep.mubr.f32.mxu0 0.0
        %1967 = vmatmul.mubr.f32.gmra.mrb[0].mxu0 %v1775
        %v1968 = vpop.f32.mrb[0].mxu0
        %v1969 = vadd.f32 %v1724, %v1968
        %v1970 = vpop.f32.mrb[0].mxu0
        %1971 = vmatprep.mubr.f32.mxu0 0.0
        %1972 = vmatmul.mubr.f32.gmra.mrb[0].mxu0 %v1778
        %v1973 = vpop.f32.mrb[0].mxu0
        %v1974 = vadd.f32 %v1724, %v1973
        %v1975 = vpop.f32.mrb[0].mxu0
        %1976 = vmatprep.mubr.f32.mxu0 0.0
        %1977 = vmatmul.mubr.f32.gmra.mrb[0].mxu0 %v1781
        %v1978 = vpop.f32.mrb[0].mxu0
        %v1979 = vadd.f32 %v1724, %v1978
        %v1980 = vpop.f32.mrb[0].mxu0
        %1981 = vmatprep.mubr.f32.mxu0 0.0
        %1982 = vmatmul.mubr.f32.gmra.mrb[0].mxu0 %v1784
        %v1983 = vpop.f32.mrb[0].mxu0
        %v1984 = vadd.f32 %v1724, %v1983
        %v1985 = vpop.f32.mrb[0].mxu0
        %1986 = vmatprep.mubr.f32.mxu0 0.0
        %1987 = vmatmul.mubr.f32.gmra.mrb[0].mxu0 %v1787
        %v1988 = vpop.f32.mrb[0].mxu0
        %v1989 = vadd.f32 %v1724, %v1988
        %v1990 = vpop.f32.mrb[0].mxu0
        %1991 = vmatprep.mubr.f32.mxu0 0.0
        %1992 = vmatmul.mubr.f32.gmra.mrb[0].mxu0 %v1790
        %v1993 = vpop.f32.mrb[0].mxu0
        %v1994 = vadd.f32 %v1724, %v1993
        %v1995 = vpop.f32.mrb[0].mxu0
        %1996 = vmatprep.mubr.f32.mxu0 0.0
        %1997 = vmatmul.mubr.f32.gmra.mrb[0].mxu0 %v1793
        %v1998 = vpop.f32.mrb[0].mxu0
        %v1999 = vadd.f32 %v1724, %v1998
        %v2000 = vpop.f32.mrb[0].mxu0
        %2001 = vmatprep.mubr.f32.mxu0 0.0
        %2002 = vmatmul.mubr.f32.gmra.mrb[0].mxu0 %v1796
        %v2003 = vpop.f32.mrb[0].mxu0
        %v2004 = vadd.f32 %v1724, %v2003
        %v2005 = vpop.f32.mrb[0].mxu0
        %2006 = vmatprep.mubr.f32.mxu0 0.0
        %2007 = vmatmul.mubr.f32.gmra.mrb[0].mxu0 %v1799
        %v2008 = vpop.f32.mrb[0].mxu0
        %v2009 = vadd.f32 %v1724, %v2008
        %v2010 = vpop.f32.mrb[0].mxu0
        %2011 = vmatprep.mubr.f32.mxu0 0.0
        %2012 = vmatmul.mubr.f32.gmra.mrb[0].mxu0 %v1802
        %v2013 = vpop.f32.mrb[0].mxu0
        %v2014 = vadd.f32 %v1724, %v2013
        %v2015 = vpop.f32.mrb[0].mxu0
        %2016 = vmatprep.mubr.f32.mxu0 0.0
        %2017 = vmatmul.mubr.f32.gmra.mrb[0].mxu0 %v1805
        %v2018 = vpop.f32.mrb[0].mxu0
        %v2019 = vadd.f32 %v1724, %v2018
        %v2020 = vpop.f32.mrb[0].mxu0
        %2021 = vmatprep.mubr.f32.mxu0 0.0
        %2022 = vmatmul.mubr.f32.gmra.mrb[0].mxu0 %v1808
        %v2023 = vpop.f32.mrb[0].mxu0
        %v2024 = vadd.f32 %v1724, %v2023
        %v2025 = vpop.f32.mrb[0].mxu0
        %2026 = vmatprep.mubr.f32.mxu0 0.0
        %2027 = vmatmul.mubr.f32.gmra.mrb[0].mxu0 %v1811
        %v2028 = vpop.f32.mrb[0].mxu0
        %v2029 = vadd.f32 %v1724, %v2028
        %v2030 = vpop.f32.mrb[0].mxu0
        %2031 = vmatprep.mubr.f32.mxu0 0.0
        %2032 = vmatmul.mubr.f32.gmra.mrb[0].mxu0 %v1814
        %v2033 = vpop.f32.mrb[0].mxu0
        %v2034 = vadd.f32 %v1724, %v2033
        %v2035 = vpop.f32.mrb[0].mxu0
        %2036 = vmatprep.mubr.f32.mxu0 0.0
        %2037 = vmatmul.mubr.f32.gmra.mrb[0].mxu0 %v1817
        %v2038 = vpop.f32.mrb[0].mxu0
        %v2039 = vadd.f32 %v1724, %v2038
        %v2040 = vpop.f32.mrb[0].mxu0
        %2041 = vmatprep.mubr.f32.mxu0 0.0
        %2042 = vmatmul.mubr.f32.gmra.mrb[0].mxu0 %v1820
        %v2043 = vpop.f32.mrb[0].mxu0
        %v2044 = vadd.f32 %v1724, %v2043
        %v2045 = vpop.f32.mrb[0].mxu0
        %2046 = vdwg.mxu0
        %v2047 = vmax.f32 %v1889, 0.0
        %v2048 = vmax.f32 %v1894, 0.0
        %v2049 = vmax.f32 %v1899, 0.0
        %v2050 = vmax.f32 %v1904, 0.0
        %v2051 = vmax.f32 %v1909, 0.0
        %v2052 = vmax.f32 %v1914, 0.0
        %v2053 = vmax.f32 %v1919, 0.0
        %v2054 = vmax.f32 %v1924, 0.0
        %v2055 = vmax.f32 %v1929, 0.0
        %v2056 = vmax.f32 %v1934, 0.0
        %v2057 = vmax.f32 %v1939, 0.0
        %v2058 = vmax.f32 %v1944, 0.0
        %v2059 = vmax.f32 %v1949, 0.0
        %v2060 = vmax.f32 %v1954, 0.0
        %v2061 = vmax.f32 %v1959, 0.0
        %v2062 = vmax.f32 %v1964, 0.0
        %v2063 = vmax.f32 %v1969, 0.0
        %v2064 = vmax.f32 %v1974, 0.0
        %v2065 = vmax.f32 %v1979, 0.0
        %v2066 = vmax.f32 %v1984, 0.0
        %v2067 = vmax.f32 %v1989, 0.0
        %v2068 = vmax.f32 %v1994, 0.0
        %v2069 = vmax.f32 %v1999, 0.0
        %v2070 = vmax.f32 %v2004, 0.0
        %v2071 = vmax.f32 %v2009, 0.0
        %v2072 = vmax.f32 %v2014, 0.0
        %v2073 = vmax.f32 %v2019, 0.0
        %v2074 = vmax.f32 %v2024, 0.0
        %v2075 = vmax.f32 %v2029, 0.0
        %v2076 = vmax.f32 %v2034, 0.0
        %v2077 = vmax.f32 %v2039, 0.0
        %v2078 = vmax.f32 %v2044, 0.0
        %v2079 = vld [vmem:[#allocation8] sm:$0xff]
        %v2080 = vld [vmem:[#allocation8 + $0x8] sm:$0xff]
        %v2081 = vld [vmem:[#allocation8 + $0x10] sm:$0xff]
        %v2082 = vld [vmem:[#allocation8 + $0x18] sm:$0xff]
        %v2083 = vld [vmem:[#allocation8 + $0x20] sm:$0xff]
        %v2084 = vld [vmem:[#allocation8 + $0x28] sm:$0xff]
        %v2085 = vld [vmem:[#allocation8 + $0x30] sm:$0xff]
        %v2086 = vld [vmem:[#allocation8 + $0x38] sm:$0xff]
        %v2087 = vld [vmem:[#allocation8 + $0x40] sm:$0xff]
        %v2088 = vld [vmem:[#allocation8 + $0x48] sm:$0xff]
        %v2089 = vld [vmem:[#allocation8 + $0x50] sm:$0xff]
        %v2090 = vld [vmem:[#allocation8 + $0x58] sm:$0xff]
        %v2091 = vld [vmem:[#allocation8 + $0x60] sm:$0xff]
        %v2092 = vld [vmem:[#allocation8 + $0x68] sm:$0xff]
        %v2093 = vld [vmem:[#allocation8 + $0x70] sm:$0xff]
        %v2094 = vld [vmem:[#allocation8 + $0x78] sm:$0xff]
        %v2095 = vld [vmem:[%s10] sm:$0x1]
        %v2097 = vlaneseq
        %v2098 = vshrl.u32 %v2097, 7
        %v2099 = vsub.s32 0, %v2098
        %v2100 = vrot.slane %v2095, %v2099
        %2102 = vmatprep.subr.mxu0 0.0
        %2103 = vmatpush1.msra.mxu0 %v2079
        %2104 = vmatprep.subr.mxu0 0.0
        %2105 = vmatpush1.msra.mxu0 %v2080
        %2106 = vmatprep.subr.mxu0 0.0
        %2107 = vmatpush1.msra.mxu0 %v2081
        %2108 = vmatprep.subr.mxu0 0.0
        %2109 = vmatpush1.msra.mxu0 %v2082
        %2110 = vmatprep.subr.mxu0 0.0
        %2111 = vmatpush1.msra.mxu0 %v2083
        %2112 = vmatprep.subr.mxu0 0.0
        %2113 = vmatpush1.msra.mxu0 %v2084
        %2114 = vmatprep.subr.mxu0 0.0
        %2115 = vmatpush1.msra.mxu0 %v2085
        %2116 = vmatprep.subr.mxu0 0.0
        %2117 = vmatpush1.msra.mxu0 %v2086
        %2118 = vmatprep.subr.mxu0 0.0
        %2119 = vmatpush1.msra.mxu0 %v2087
        %2120 = vmatprep.subr.mxu0 0.0
        %2121 = vmatpush1.msra.mxu0 %v2088
        %2122 = vmatprep.subr.mxu0 0.0
        %2123 = vmatpush1.msra.mxu0 %v2089
        %2124 = vmatprep.subr.mxu0 0.0
        %2125 = vmatpush1.msra.mxu0 %v2090
        %2126 = vmatprep.subr.mxu0 0.0
        %2127 = vmatpush1.msra.mxu0 %v2091
        %2128 = vmatprep.subr.mxu0 0.0
        %2129 = vmatpush1.msra.mxu0 %v2092
        %2130 = vmatprep.subr.mxu0 0.0
        %2131 = vmatpush1.msra.mxu0 %v2093
        %2132 = vmatprep.subr.mxu0 0.0
        %2133 = vmatpush1.msra.mxu0 %v2094
        %2134 = vmatprep.subr.mxu0 0.0
        %2135 = vmatpush1.msra.mxu0 0.0
        %2136 = vmatprep.subr.mxu0 0.0
        %2137 = vmatpush1.msra.mxu0 0.0
        %2138 = vmatprep.subr.mxu0 0.0
        %2139 = vmatpush1.msra.mxu0 0.0
        %2140 = vmatprep.subr.mxu0 0.0
        %2141 = vmatpush1.msra.mxu0 0.0
        %2142 = vmatprep.subr.mxu0 0.0
        %2143 = vmatpush1.msra.mxu0 0.0
        %2144 = vmatprep.subr.mxu0 0.0
        %2145 = vmatpush1.msra.mxu0 0.0
        %2146 = vmatprep.subr.mxu0 0.0
        %2147 = vmatpush1.msra.mxu0 0.0
        %2148 = vmatprep.subr.mxu0 0.0
        %2149 = vmatpush1.msra.mxu0 0.0
        %2150 = vmatprep.subr.mxu0 0.0
        %2151 = vmatpush1.msra.mxu0 0.0
        %2152 = vmatprep.subr.mxu0 0.0
        %2153 = vmatpush1.msra.mxu0 0.0
        %2154 = vmatprep.subr.mxu0 0.0
        %2155 = vmatpush1.msra.mxu0 0.0
        %2156 = vmatprep.subr.mxu0 0.0
        %2157 = vmatpush1.msra.mxu0 0.0
        %2158 = vmatprep.subr.mxu0 0.0
        %2159 = vmatpush1.msra.mxu0 0.0
        %2160 = vmatprep.subr.mxu0 0.0
        %2161 = vmatpush1.msra.mxu0 0.0
        %2162 = vmatprep.subr.mxu0 0.0
        %2163 = vmatpush1.msra.mxu0 0.0
        %2164 = vmatprep.subr.mxu0 0.0
        %2165 = vmatpush1.msra.mxu0 0.0
        %2166 = vmatprep.mubr.f32.mxu0 0.0
        %2167 = vmatmul.mubr.f32.gmra.mrb[0].mxu0 %v2047
        %v2168 = vpop.f32.mrb[0].mxu0
        %v2169 = vadd.f32 %v2100, %v2168
        %v2170 = vpop.f32.mrb[0].mxu0
        %2171 = vmatprep.mubr.f32.mxu0 0.0
        %2172 = vmatmul.mubr.f32.gmra.mrb[0].mxu0 %v2048
        %v2173 = vpop.f32.mrb[0].mxu0
        %v2174 = vadd.f32 %v2100, %v2173
        %v2175 = vpop.f32.mrb[0].mxu0
        %2176 = vmatprep.mubr.f32.mxu0 0.0
        %2177 = vmatmul.mubr.f32.gmra.mrb[0].mxu0 %v2049
        %v2178 = vpop.f32.mrb[0].mxu0
        %v2179 = vadd.f32 %v2100, %v2178
        %v2180 = vpop.f32.mrb[0].mxu0
        %2181 = vmatprep.mubr.f32.mxu0 0.0
        %2182 = vmatmul.mubr.f32.gmra.mrb[0].mxu0 %v2050
        %v2183 = vpop.f32.mrb[0].mxu0
        %v2184 = vadd.f32 %v2100, %v2183
        %v2185 = vpop.f32.mrb[0].mxu0
        %2186 = vmatprep.mubr.f32.mxu0 0.0
        %2187 = vmatmul.mubr.f32.gmra.mrb[0].mxu0 %v2051
        %v2188 = vpop.f32.mrb[0].mxu0
        %v2189 = vadd.f32 %v2100, %v2188
        %v2190 = vpop.f32.mrb[0].mxu0
        %2191 = vmatprep.mubr.f32.mxu0 0.0
        %2192 = vmatmul.mubr.f32.gmra.mrb[0].mxu0 %v2052
        %v2193 = vpop.f32.mrb[0].mxu0
        %v2194 = vadd.f32 %v2100, %v2193
        %v2195 = vpop.f32.mrb[0].mxu0
        %2196 = vmatprep.mubr.f32.mxu0 0.0
        %2197 = vmatmul.mubr.f32.gmra.mrb[0].mxu0 %v2053
        %v2198 = vpop.f32.mrb[0].mxu0
        %v2199 = vadd.f32 %v2100, %v2198
        %v2200 = vpop.f32.mrb[0].mxu0
        %2201 = vmatprep.mubr.f32.mxu0 0.0
        %2202 = vmatmul.mubr.f32.gmra.mrb[0].mxu0 %v2054
        %v2203 = vpop.f32.mrb[0].mxu0
        %v2204 = vadd.f32 %v2100, %v2203
        %v2205 = vpop.f32.mrb[0].mxu0
        %2206 = vmatprep.mubr.f32.mxu0 0.0
        %2207 = vmatmul.mubr.f32.gmra.mrb[0].mxu0 %v2055
        %v2208 = vpop.f32.mrb[0].mxu0
        %v2209 = vadd.f32 %v2100, %v2208
        %v2210 = vpop.f32.mrb[0].mxu0
        %2211 = vmatprep.mubr.f32.mxu0 0.0
        %2212 = vmatmul.mubr.f32.gmra.mrb[0].mxu0 %v2056
        %v2213 = vpop.f32.mrb[0].mxu0
        %v2214 = vadd.f32 %v2100, %v2213
        %v2215 = vpop.f32.mrb[0].mxu0
        %2216 = vmatprep.mubr.f32.mxu0 0.0
        %2217 = vmatmul.mubr.f32.gmra.mrb[0].mxu0 %v2057
        %v2218 = vpop.f32.mrb[0].mxu0
        %v2219 = vadd.f32 %v2100, %v2218
        %v2220 = vpop.f32.mrb[0].mxu0
        %2221 = vmatprep.mubr.f32.mxu0 0.0
        %2222 = vmatmul.mubr.f32.gmra.mrb[0].mxu0 %v2058
        %v2223 = vpop.f32.mrb[0].mxu0
        %v2224 = vadd.f32 %v2100, %v2223
        %v2225 = vpop.f32.mrb[0].mxu0
        %2226 = vmatprep.mubr.f32.mxu0 0.0
        %2227 = vmatmul.mubr.f32.gmra.mrb[0].mxu0 %v2059
        %v2228 = vpop.f32.mrb[0].mxu0
        %v2229 = vadd.f32 %v2100, %v2228
        %v2230 = vpop.f32.mrb[0].mxu0
        %2231 = vmatprep.mubr.f32.mxu0 0.0
        %2232 = vmatmul.mubr.f32.gmra.mrb[0].mxu0 %v2060
        %v2233 = vpop.f32.mrb[0].mxu0
        %v2234 = vadd.f32 %v2100, %v2233
        %v2235 = vpop.f32.mrb[0].mxu0
        %2236 = vmatprep.mubr.f32.mxu0 0.0
        %2237 = vmatmul.mubr.f32.gmra.mrb[0].mxu0 %v2061
        %v2238 = vpop.f32.mrb[0].mxu0
        %v2239 = vadd.f32 %v2100, %v2238
        %v2240 = vpop.f32.mrb[0].mxu0
        %2241 = vmatprep.mubr.f32.mxu0 0.0
        %2242 = vmatmul.mubr.f32.gmra.mrb[0].mxu0 %v2062
        %v2243 = vpop.f32.mrb[0].mxu0
        %v2244 = vadd.f32 %v2100, %v2243
        %v2245 = vpop.f32.mrb[0].mxu0
        %2246 = vmatprep.mubr.f32.mxu0 0.0
        %2247 = vmatmul.mubr.f32.gmra.mrb[0].mxu0 %v2063
        %v2248 = vpop.f32.mrb[0].mxu0
        %v2249 = vadd.f32 %v2100, %v2248
        %v2250 = vpop.f32.mrb[0].mxu0
        %2251 = vmatprep.mubr.f32.mxu0 0.0
        %2252 = vmatmul.mubr.f32.gmra.mrb[0].mxu0 %v2064
        %v2253 = vpop.f32.mrb[0].mxu0
        %v2254 = vadd.f32 %v2100, %v2253
        %v2255 = vpop.f32.mrb[0].mxu0
        %2256 = vmatprep.mubr.f32.mxu0 0.0
        %2257 = vmatmul.mubr.f32.gmra.mrb[0].mxu0 %v2065
        %v2258 = vpop.f32.mrb[0].mxu0
        %v2259 = vadd.f32 %v2100, %v2258
        %v2260 = vpop.f32.mrb[0].mxu0
        %2261 = vmatprep.mubr.f32.mxu0 0.0
        %2262 = vmatmul.mubr.f32.gmra.mrb[0].mxu0 %v2066
        %v2263 = vpop.f32.mrb[0].mxu0
        %v2264 = vadd.f32 %v2100, %v2263
        %v2265 = vpop.f32.mrb[0].mxu0
        %2266 = vmatprep.mubr.f32.mxu0 0.0
        %2267 = vmatmul.mubr.f32.gmra.mrb[0].mxu0 %v2067
        %v2268 = vpop.f32.mrb[0].mxu0
        %v2269 = vadd.f32 %v2100, %v2268
        %v2270 = vpop.f32.mrb[0].mxu0
        %2271 = vmatprep.mubr.f32.mxu0 0.0
        %2272 = vmatmul.mubr.f32.gmra.mrb[0].mxu0 %v2068
        %v2273 = vpop.f32.mrb[0].mxu0
        %v2274 = vadd.f32 %v2100, %v2273
        %v2275 = vpop.f32.mrb[0].mxu0
        %2276 = vmatprep.mubr.f32.mxu0 0.0
        %2277 = vmatmul.mubr.f32.gmra.mrb[0].mxu0 %v2069
        %v2278 = vpop.f32.mrb[0].mxu0
        %v2279 = vadd.f32 %v2100, %v2278
        %v2280 = vpop.f32.mrb[0].mxu0
        %2281 = vmatprep.mubr.f32.mxu0 0.0
        %2282 = vmatmul.mubr.f32.gmra.mrb[0].mxu0 %v2070
        %v2283 = vpop.f32.mrb[0].mxu0
        %v2284 = vadd.f32 %v2100, %v2283
        %v2285 = vpop.f32.mrb[0].mxu0
        %2286 = vmatprep.mubr.f32.mxu0 0.0
        %2287 = vmatmul.mubr.f32.gmra.mrb[0].mxu0 %v2071
        %v2288 = vpop.f32.mrb[0].mxu0
        %v2289 = vadd.f32 %v2100, %v2288
        %v2290 = vpop.f32.mrb[0].mxu0
        %2291 = vmatprep.mubr.f32.mxu0 0.0
        %2292 = vmatmul.mubr.f32.gmra.mrb[0].mxu0 %v2072
        %v2293 = vpop.f32.mrb[0].mxu0
        %v2294 = vadd.f32 %v2100, %v2293
        %v2295 = vpop.f32.mrb[0].mxu0
        %2296 = vmatprep.mubr.f32.mxu0 0.0
        %2297 = vmatmul.mubr.f32.gmra.mrb[0].mxu0 %v2073
        %v2298 = vpop.f32.mrb[0].mxu0
        %v2299 = vadd.f32 %v2100, %v2298
        %v2300 = vpop.f32.mrb[0].mxu0
        %2301 = vmatprep.mubr.f32.mxu0 0.0
        %2302 = vmatmul.mubr.f32.gmra.mrb[0].mxu0 %v2074
        %v2303 = vpop.f32.mrb[0].mxu0
        %v2304 = vadd.f32 %v2100, %v2303
        %v2305 = vpop.f32.mrb[0].mxu0
        %2306 = vmatprep.mubr.f32.mxu0 0.0
        %2307 = vmatmul.mubr.f32.gmra.mrb[0].mxu0 %v2075
        %v2308 = vpop.f32.mrb[0].mxu0
        %v2309 = vadd.f32 %v2100, %v2308
        %v2310 = vpop.f32.mrb[0].mxu0
        %2311 = vmatprep.mubr.f32.mxu0 0.0
        %2312 = vmatmul.mubr.f32.gmra.mrb[0].mxu0 %v2076
        %v2313 = vpop.f32.mrb[0].mxu0
        %v2314 = vadd.f32 %v2100, %v2313
        %v2315 = vpop.f32.mrb[0].mxu0
        %2316 = vmatprep.mubr.f32.mxu0 0.0
        %2317 = vmatmul.mubr.f32.gmra.mrb[0].mxu0 %v2077
        %v2318 = vpop.f32.mrb[0].mxu0
        %v2319 = vadd.f32 %v2100, %v2318
        %v2320 = vpop.f32.mrb[0].mxu0
        %2321 = vmatprep.mubr.f32.mxu0 0.0
        %2322 = vmatmul.mubr.f32.gmra.mrb[0].mxu0 %v2078
        %v2323 = vpop.f32.mrb[0].mxu0
        %v2324 = vadd.f32 %v2100, %v2323
        %v2325 = vpop.f32.mrb[0].mxu0
        %2326 = vdwg.mxu0
        %v2327 = vmax.f32 %v2169, 0.0
        %v2328 = vmax.f32 %v2174, 0.0
        %v2329 = vmax.f32 %v2179, 0.0
        %v2330 = vmax.f32 %v2184, 0.0
        %v2331 = vmax.f32 %v2189, 0.0
        %v2332 = vmax.f32 %v2194, 0.0
        %v2333 = vmax.f32 %v2199, 0.0
        %v2334 = vmax.f32 %v2204, 0.0
        %v2335 = vmax.f32 %v2209, 0.0
        %v2336 = vmax.f32 %v2214, 0.0
        %v2337 = vmax.f32 %v2219, 0.0
        %v2338 = vmax.f32 %v2224, 0.0
        %v2339 = vmax.f32 %v2229, 0.0
        %v2340 = vmax.f32 %v2234, 0.0
        %v2341 = vmax.f32 %v2239, 0.0
        %v2342 = vmax.f32 %v2244, 0.0
        %v2343 = vmax.f32 %v2249, 0.0
        %v2344 = vmax.f32 %v2254, 0.0
        %v2345 = vmax.f32 %v2259, 0.0
        %v2346 = vmax.f32 %v2264, 0.0
        %v2347 = vmax.f32 %v2269, 0.0
        %v2348 = vmax.f32 %v2274, 0.0
        %v2349 = vmax.f32 %v2279, 0.0
        %v2350 = vmax.f32 %v2284, 0.0
        %v2351 = vmax.f32 %v2289, 0.0
        %v2352 = vmax.f32 %v2294, 0.0
        %v2353 = vmax.f32 %v2299, 0.0
        %v2354 = vmax.f32 %v2304, 0.0
        %v2355 = vmax.f32 %v2309, 0.0
        %v2356 = vmax.f32 %v2314, 0.0
        %v2357 = vmax.f32 %v2319, 0.0
        %v2358 = vmax.f32 %v2324, 0.0
        %v2359 = vmax.f32 %v2327, %v2331
        %v2360 = vmax.f32 %v2328, %v2332
        %v2361 = vmax.f32 %v2329, %v2333
        %v2362 = vmax.f32 %v2330, %v2334
        %v2363 = vmax.f32 %v2359, %v2335
        %v2364 = vmax.f32 %v2360, %v2336
        %v2365 = vmax.f32 %v2361, %v2337
        %v2366 = vmax.f32 %v2362, %v2338
        %v2367 = vmax.f32 %v2363, %v2339
        %v2368 = vmax.f32 %v2364, %v2340
        %v2369 = vmax.f32 %v2365, %v2341
        %v2370 = vmax.f32 %v2366, %v2342
        %v2371 = vmax.f32 %v2367, %v2368
        %v2372 = vmax.f32 %v2369, %v2370
        %v2373 = vmax.f32 %v2371, %v2372
        %v2374 = vrot.slane %v2373, 4
        %v2375 = vmax.f32 %v2373, %v2374
        %v2376 = vrot.slane %v2375, 2
        %v2377 = vmax.f32 %v2375, %v2376
        %v2378 = vrot.slane %v2377, 1
        %v2379 = vmax.f32 %v2377, %v2378
        %v2380 = vmax.f32 %v2343, %v2347
        %v2381 = vmax.f32 %v2344, %v2348
        %v2382 = vmax.f32 %v2345, %v2349
        %v2383 = vmax.f32 %v2346, %v2350
        %v2384 = vmax.f32 %v2380, %v2351
        %v2385 = vmax.f32 %v2381, %v2352
        %v2386 = vmax.f32 %v2382, %v2353
        %v2387 = vmax.f32 %v2383, %v2354
        %v2388 = vmax.f32 %v2384, %v2355
        %v2389 = vmax.f32 %v2385, %v2356
        %v2390 = vmax.f32 %v2386, %v2357
        %v2391 = vmax.f32 %v2387, %v2358
        %v2392 = vmax.f32 %v2388, %v2389
        %v2393 = vmax.f32 %v2390, %v2391
        %v2394 = vmax.f32 %v2392, %v2393
        %v2395 = vrot.slane %v2394, 4
        %v2396 = vmax.f32 %v2394, %v2395
        %v2397 = vrot.slane %v2396, 2
        %v2398 = vmax.f32 %v2396, %v2397
        %v2399 = vrot.slane %v2398, 1
        %v2400 = vmax.f32 %v2398, %v2399
        %vm2401 = vcmask 1040384
        %v2402 = vsel %vm2401, %v2379, %v2400
        %2403 = vst [vmem:[%s437] sm:$0x3] %v2402
        %s2404 = sand.u32 %s272, 1
        %s2405 = scalar_lea.sflag [#allocation4], %s2404
        %s2406 = sand.u32 %s272, 1
        %s2407 = smul.addr %s2406, 2
        %s2408 = scalar_lea.vmem [#allocation10], %s2407
        // Predicated region
        $region81: #{tpu_custom_call.1} parent=63 // pred_check
          %p2409 = pneg %p282
        $region82: #{tpu_custom_call.1} parent=63 // pred_check_branch
          %2411 = sbr.rel (%p2409) target = $region84
        $region83: #{tpu_custom_call.1} parent=63 // pred_region
          %s2413 = ssub.s32 32, 32
          %2414 = vsyncadd %s2405, %s2413
          %s2415 = smul.addr %s28, 32
          %s2416 = scalar_lea.hbm %s11, %s2415
          %s2418 = sshll.u32 %s2408, 4
          %s2419 = int_to_ptr.vmem [resolvable:$true] %s2418
          %2421 = dma.vmem_to_hbm [thread:$0]  %s2419, 32, %s2416, %s2405
        $region84: #{tpu_custom_call.1} parent=63 // pred_fallthru
          _
      $region64: #{tpu_custom_call.1} parent=5 // pred_fallthru
        _
      %p2422 = scmp.le.s32.totalorder 2, %s23
      // Predicated region
      $region85: #{tpu_custom_call.1} parent=5 // pred_check
        %p2423 = pneg %p2422
      $region86: #{tpu_custom_call.1} parent=5 // pred_check_branch
        %2425 = sbr.rel (%p2423) target = $region88
      $region87: #{tpu_custom_call.1} parent=5 // pred_region
        %s2426 = ssub.s32 %s23, 2
        // Predicated region
        $region89: #{tpu_custom_call.1} parent=87 // pred_check
          %p2427 = pneg %p288
        $region90: #{tpu_custom_call.1} parent=87 // pred_check_branch
          %2429 = sbr.rel (%p2427) target = $region92
        $region91: #{tpu_custom_call.1} parent=87 // pred_region
          %s2430 = sand.u32 %s273, 1
          %s2431 = scalar_lea.sflag [#allocation4], %s2430
          %s2432 = sand.u32 %s273, 1
          %s2433 = smul.addr %s2432, 2
          %s2434 = scalar_lea.vmem [#allocation10], %s2433
          %2435 = dma.done %s2431, 32
        $region92: #{tpu_custom_call.1} parent=87 // pred_fallthru
          _
      $region88: #{tpu_custom_call.1} parent=5 // pred_fallthru
        _
    $region6: #{tpu_custom_call.1} parent=1 // loop_footer
      %s27 = sadd.s32 1, %s23
    $region7: #{tpu_custom_call.1} parent=1 // loop_footer_branch
      %22 = sbr.rel target = $region3
    $region8: #{tpu_custom_call.1} parent=1 // loop_exit
      _
    %2436 = vsyncpa [#allocation3], 1
    %s2437 = scalar_lea.sflag [#allocation3], 1
    %2438 = vsyncpa %s2437, 1
    %2439 = vsyncpa [#allocation6], 1
    %2440 = vsyncpa [#allocation9], 1
    %2441 = vsyncpa [#allocation4], 1
    %s2442 = scalar_lea.sflag [#allocation4], 1
    %2443 = vsyncpa %s2442, 1

</llo_original>
